<compile_context>
chip_gen: v5e
topology: v5e:2x2
jax: 0.10.0
libtpu: 0.0.40
codegen_flags: <defaults>
</compile_context>

<pallas_src>
import functools

import jax
import jax.numpy as jnp
from jax.experimental import pallas as pl
from jax.experimental.pallas import tpu as pltpu


def encoder_block_kernel(x_ref, w1_ref, b1_ref, dw_ref, bdw_ref, w2_ref, b2_ref,
                         o_ref, *, dilations, seg_len):
    """Fused MBConv stack for one batch tile (channels on sublanes).

    x_ref   : (C, Bt*L)      input tile; batch folded into the lane axis
    w1_ref  : (NL, 2C, C)    expand pointwise weights (bf16)
    b1_ref  : (NL, 2C, 1)    expand bias (f32)
    dw_ref  : (NL, 2C, K)    depthwise weights (f32)
    bdw_ref : (NL, 2C, 1)    depthwise bias (f32)
    w2_ref  : (NL, C, 2C)    project pointwise weights (bf16)
    b2_ref  : (NL, C, 1)     project bias (f32)
    o_ref   : (C, Bt*L)      output tile
    """
    _, Lf = x_ref.shape
    _, C2, K = dw_ref.shape
    L = seg_len

    x = x_ref[...].astype(jnp.float32)                          # (C, Bt*L)
    # Position of each lane within its length-L batch segment.  Hoisted once:
    # iotas/broadcasts are not CSE'd inside the layer loop.
    pos = jax.lax.broadcasted_iota(jnp.int32, (C2, Lf), 1) % L

    for i, dil in enumerate(dilations):                          # static unroll
        pad = dil * (K - 1) // 2
        w1 = w1_ref[i]                                           # (2C, C)  bf16
        b1 = b1_ref[i]                                           # (2C, 1)  f32
        dw = dw_ref[i]                                           # (2C, K)  f32 (one load)
        bdw = bdw_ref[i]                                         # (2C, 1)  f32
        w2 = w2_ref[i]                                           # (C, 2C)  bf16
        b2 = b2_ref[i]                                           # (C, 1)   f32

        # --- expand 1x1 conv (MXU, bf16 operands, f32 acc, N = Bt*L) + SiLU ---
        h = jnp.dot(w1, x.astype(jnp.bfloat16),
                    preferred_element_type=jnp.float32) + b1
        h = h * jax.nn.sigmoid(h)                                # (2C, Bt*L) f32

        # --- depthwise dilated conv, 'same' zero padding ---------------------
        # Shifted views via lane roll (XLU slot) + ONE edge compare per
        # non-center tap.  The per-segment mask also zeroes taps that would
        # leak across the folded batch boundary.  All offsets are static.
        acc = None
        for k in range(K):
            off = k * dil - pad                                  # static int
            if off == 0:
                tap = h
            else:
                shifted = pltpu.roll(h, (-off) % Lf, axis=1)     # shifted[:, l] = h[:, l+off]
                mask = (pos < L - off) if off > 0 else (pos >= -off)
                tap = jnp.where(mask, shifted, 0.0)
            term = tap * dw[:, k:k + 1]
            acc = term if acc is None else acc + term
        acc = acc + bdw                                          # lane-broadcast bias
        a2 = acc * jax.nn.sigmoid(acc)                           # (2C, Bt*L) f32

        # --- project 1x1 conv + residual -------------------------------------
        y = jnp.dot(w2, a2.astype(jnp.bfloat16),
                    preferred_element_type=jnp.float32) + b2
        x = x + y

    o_ref[...] = x.astype(o_ref.dtype)


def _pick_batch_tile(B, C, L, vmem_budget_bytes=48 << 20):
    """Largest divisor of B whose per-step working set fits a v7x-safe budget.

    Batching per grid step amortizes the ~0.35us step overhead and widens the
    MXU N dimension; the budget (~48 MiB) is sized against v7x's 64 MiB
    per-core VMEM (v5e/v6e have more headroom).
    """
    def est(bt):
        lanes = bt * L
        # in/out blocks double-buffered (f32) + ~5 live (2C, lanes) f32 tiles.
        return 4 * lanes * (2 * 2 * C + 5 * 2 * C)

    best = 1
    for bt in range(1, B + 1):
        if B % bt == 0 and est(bt) <= vmem_budget_bytes:
            best = bt
    return best


def encoder_block_pallas(x, layer_params, *, kernel_size, dilation_factor=2,
                         batch_tile=None):
    """x: (B, C, L) float32 (PyTorch Conv1d NCL layout)."""
    B, C, L = x.shape
    C2 = 2 * C
    K = kernel_size
    NL = len(layer_params)
    dilations = tuple(1 if i == 0 else dilation_factor ** i for i in range(NL))
    for d in dilations:
        # 'same' padding needs an even receptive-field extension; an odd
        # (K-1)*d would silently mis-pad (no runtime bounds check in VMEM).
        assert (K - 1) * d % 2 == 0, "(kernel_size-1)*dilation must be even"

    Bt = batch_tile if batch_tile is not None else _pick_batch_tile(B, C, L)
    assert B % Bt == 0, "batch_tile must divide B"
    Lf = Bt * L
    assert Lf % 128 == 0 or Bt == B, "batch_tile*L should be lane aligned (128)"

    # Stack per-layer weights once; MXU operands pre-cast to bf16 here.
    w1s = jnp.stack([p[0] for p in layer_params]).astype(jnp.bfloat16)   # (NL, 2C, C)
    b1s = jnp.stack([p[1] for p in layer_params])                        # (NL, 2C, 1)
    dws = jnp.stack([p[2] for p in layer_params])                        # (NL, 2C, K)
    bdws = jnp.stack([p[3] for p in layer_params])                       # (NL, 2C, 1)
    w2s = jnp.stack([p[4] for p in layer_params]).astype(jnp.bfloat16)   # (NL, C, 2C)
    b2s = jnp.stack([p[5] for p in layer_params])                        # (NL, C, 1)

    # Layout plumbing (outside the kernel): fold batch into the lane axis so
    # the kernel sees lane-dense (C, Bt*L) tiles.
    x_flat = jnp.transpose(x, (1, 0, 2)).reshape(C, B * L)

    kern = functools.partial(encoder_block_kernel, dilations=dilations, seg_len=L)
    const = lambda b: (0, 0, 0)     # weights resident across the whole grid

    # Advisory cost hint for XLA's scheduler around the custom call.
    flops = 2 * NL * B * L * (C2 * C + C2 * K + C * C2)
    transcendentals = 2 * NL * B * L * C2
    weight_bytes = ((w1s.size + w2s.size) * 2
                    + (b1s.size + dws.size + bdws.size + b2s.size) * 4)
    bytes_accessed = 2 * B * C * L * 4 + weight_bytes

    out_flat = pl.pallas_call(
        kern,
        out_shape=jax.ShapeDtypeStruct((C, B * L), x.dtype),
        grid_spec=pltpu.PrefetchScalarGridSpec(
            num_scalar_prefetch=0,
            grid=(B // Bt,),
            in_specs=[
                pl.BlockSpec((C, Lf), lambda b: (0, b)),           # x (batch-folded)
                pl.BlockSpec((NL, C2, C), const),                  # w1 (bf16)
                pl.BlockSpec((NL, C2, 1), const),                  # b1
                pl.BlockSpec((NL, C2, K), const),                  # dw
                pl.BlockSpec((NL, C2, 1), const),                  # bdw
                pl.BlockSpec((NL, C, C2), const),                  # w2 (bf16)
                pl.BlockSpec((NL, C, 1), const),                   # b2
            ],
            out_specs=pl.BlockSpec((C, Lf), lambda b: (0, b)),
        ),
        compiler_params=pltpu.CompilerParams(
            dimension_semantics=("parallel",)),
        cost_estimate=pl.CostEstimate(
            flops=int(flops),
            transcendentals=int(transcendentals),
            bytes_accessed=int(bytes_accessed)),
    )(x_flat, w1s, b1s, dws, bdws, w2s, b2s)

    return jnp.transpose(out_flat.reshape(C, B, L), (1, 0, 2))


def init_mbconv_params(key, channels, kernel_size):
    """Deterministic synthetic weights for one MBConv layer (NCL layout)."""
    C, C2 = channels, 2 * channels
    k1, k2, k3, k4, k5, k6 = jax.random.split(key, 6)
    s = 0.2
    w1 = jax.random.normal(k1, (C2, C), jnp.float32) * s            # expand 1x1
    b1 = jax.random.normal(k2, (C2, 1), jnp.float32) * s
    dw = jax.random.normal(k3, (C2, kernel_size), jnp.float32) * s  # depthwise
    bdw = jax.random.normal(k4, (C2, 1), jnp.float32) * s
    w2 = jax.random.normal(k5, (C, C2), jnp.float32) * s            # project 1x1
    b2 = jax.random.normal(k6, (C, 1), jnp.float32) * s
    return (w1, b1, dw, bdw, w2, b2)


# ------------- pure-JAX reference (mirrors the kernel's bf16 matmuls) -------------
def mbconv_ref(x, params, kernel_size, dilation):
    w1, b1, dw, bdw, w2, b2 = params
    L = x.shape[2]
    pad = dilation * (kernel_size - 1) // 2
    h = jnp.einsum("ec,bcl->bel", w1.astype(jnp.bfloat16), x.astype(jnp.bfloat16),
                   preferred_element_type=jnp.float32) + b1
    h = h * jax.nn.sigmoid(h)
    hp = jnp.pad(h, ((0, 0), (0, 0), (pad, pad)))
    acc = bdw + sum(hp[:, :, k * dilation:k * dilation + L] * dw[:, k:k + 1]
                    for k in range(kernel_size))
    a2 = acc * jax.nn.sigmoid(acc)
    y = jnp.einsum("ce,bel->bcl", w2.astype(jnp.bfloat16), a2.astype(jnp.bfloat16),
                   preferred_element_type=jnp.float32) + b2
    return x + y


def encoder_block_ref(x, layer_params, kernel_size, dilation_factor=2):
    out = x
    for i, params in enumerate(layer_params):
        dilation = 1 if i == 0 else dilation_factor ** i
        out = mbconv_ref(out, params, kernel_size, dilation)
    return out


if __name__ == "__main__":
    # Small shapes: EncoderBlock(channels=8, kernel=3, seq_len=128, num_layers=3).
    B, C, L = 2, 8, 128
    kernel_size = 3
    num_layers = 3
    dilation_factor = 2

    root = jax.random.PRNGKey(0)
    kx, kp = jax.random.split(root)
    x = jax.random.normal(kx, (B, C, L), jnp.float32)     # PyTorch NCL layout

    layer_keys = jax.random.split(kp, num_layers)
    layer_params = [init_mbconv_params(k, C, kernel_size) for k in layer_keys]

    out = encoder_block_pallas(x, layer_params,
                               kernel_size=kernel_size,
                               dilation_factor=dilation_factor)
    out = jax.block_until_ready(out)

    ref = encoder_block_ref(x, layer_params, kernel_size, dilation_factor)
    assert out.shape == (B, C, L)
    assert jnp.allclose(out, ref, atol=2e-3, rtol=2e-3), \
        float(jnp.max(jnp.abs(out - ref)))

    print("KERNEL_OK")
</pallas_src>

<mosaic_0001>
module attributes {stable_mosaic.version = 11 : i64} {
  func.func @encoder_block_kernel(%arg0: i32, %arg1: memref<8x256xf32, #tpu.memory_space<vmem>>, %arg2: memref<3x16x8xbf16, #tpu.memory_space<vmem>>, %arg3: memref<3x16x1xf32, #tpu.memory_space<vmem>>, %arg4: memref<3x16x3xf32, #tpu.memory_space<vmem>>, %arg5: memref<3x16x1xf32, #tpu.memory_space<vmem>>, %arg6: memref<3x8x16xbf16, #tpu.memory_space<vmem>>, %arg7: memref<3x8x1xf32, #tpu.memory_space<vmem>>, %arg8: memref<8x256xf32, #tpu.memory_space<vmem>>) attributes {dimension_semantics = [#tpu.dimension_semantics<parallel>], iteration_bounds = array<i64: 1>, scalar_prefetch = 0 : i64, scratch_operands = 0 : i64, tpu.core_type = #tpu.core_type<tc>, window_params = [{transform_indices = @transform_0, window_bounds = array<i64: 8, 256>}, {pipeline_mode = #tpu.pipeline_mode<synchronous>, transform_indices = @transform_1, window_bounds = array<i64: 3, 16, 8>}, {pipeline_mode = #tpu.pipeline_mode<synchronous>, transform_indices = @transform_2, window_bounds = array<i64: 3, 16, 1>}, {pipeline_mode = #tpu.pipeline_mode<synchronous>, transform_indices = @transform_3, window_bounds = array<i64: 3, 16, 3>}, {pipeline_mode = #tpu.pipeline_mode<synchronous>, transform_indices = @transform_4, window_bounds = array<i64: 3, 16, 1>}, {pipeline_mode = #tpu.pipeline_mode<synchronous>, transform_indices = @transform_5, window_bounds = array<i64: 3, 8, 16>}, {pipeline_mode = #tpu.pipeline_mode<synchronous>, transform_indices = @transform_6, window_bounds = array<i64: 3, 8, 1>}, {transform_indices = @transform_7, window_bounds = array<i64: 8, 256>}]} {
    %c0 = arith.constant 0 : index
    %c0_0 = arith.constant 0 : index
    %0 = vector.load %arg1[%c0, %c0_0] : memref<8x256xf32, #tpu.memory_space<vmem>>, vector<8x256xf32>
    %1 = tpu.iota {dimensions = array<i32: 1>} : vector<16x256xi32>
    %c128_i32 = arith.constant 128 : i32
    %c0_i32 = arith.constant 0 : i32
    %2 = arith.cmpi eq, %c128_i32, %c0_i32 : i32
    %c1_i32 = arith.constant 1 : i32
    %3 = arith.select %2, %c1_i32, %c128_i32 : i32
    %4 = vector.broadcast %3 : i32 to vector<16x256xi32>
    %5 = arith.remsi %1, %4 : vector<16x256xi32>
    %c0_i32_1 = arith.constant 0 : i32
    %6 = vector.broadcast %c0_i32_1 : i32 to vector<16x256xi32>
    %7 = arith.cmpi ne, %5, %6 : vector<16x256xi32>
    %c0_i32_2 = arith.constant 0 : i32
    %8 = vector.broadcast %c0_i32_2 : i32 to vector<16x256xi32>
    %9 = arith.cmpi slt, %5, %8 : vector<16x256xi32>
    %c0_i32_3 = arith.constant 0 : i32
    %10 = arith.cmpi slt, %3, %c0_i32_3 : i32
    %11 = vector.broadcast %10 : i1 to vector<16x256xi1>
    %12 = vector.broadcast %11 : vector<16x256xi1> to vector<16x256xi1>
    %13 = arith.xori %9, %12 : vector<16x256xi1>
    %14 = arith.andi %13, %7 : vector<16x256xi1>
    %15 = vector.broadcast %3 : i32 to vector<16x256xi32>
    %16 = arith.addi %5, %15 : vector<16x256xi32>
    %17 = arith.select %14, %16, %5 : vector<16x256xi1>, vector<16x256xi32>
    %c0_4 = arith.constant 0 : index
    %c0_5 = arith.constant 0 : index
    %c0_6 = arith.constant 0 : index
    %18 = vector.load %arg2[%c0_4, %c0_5, %c0_6] : memref<3x16x8xbf16, #tpu.memory_space<vmem>>, vector<1x16x8xbf16>
    %19 = vector.shape_cast %18 : vector<1x16x8xbf16> to vector<16x8xbf16>
    %c0_7 = arith.constant 0 : index
    %c0_8 = arith.constant 0 : index
    %c0_9 = arith.constant 0 : index
    %20 = vector.load %arg3[%c0_7, %c0_8, %c0_9] : memref<3x16x1xf32, #tpu.memory_space<vmem>>, vector<1x16x1xf32>
    %21 = vector.shape_cast %20 : vector<1x16x1xf32> to vector<16x1xf32>
    %c0_10 = arith.constant 0 : index
    %c0_11 = arith.constant 0 : index
    %c0_12 = arith.constant 0 : index
    %22 = vector.load %arg4[%c0_10, %c0_11, %c0_12] : memref<3x16x3xf32, #tpu.memory_space<vmem>>, vector<1x16x3xf32>
    %23 = vector.shape_cast %22 : vector<1x16x3xf32> to vector<16x3xf32>
    %c0_13 = arith.constant 0 : index
    %c0_14 = arith.constant 0 : index
    %c0_15 = arith.constant 0 : index
    %24 = vector.load %arg5[%c0_13, %c0_14, %c0_15] : memref<3x16x1xf32, #tpu.memory_space<vmem>>, vector<1x16x1xf32>
    %25 = vector.shape_cast %24 : vector<1x16x1xf32> to vector<16x1xf32>
    %c0_16 = arith.constant 0 : index
    %c0_17 = arith.constant 0 : index
    %c0_18 = arith.constant 0 : index
    %26 = vector.load %arg6[%c0_16, %c0_17, %c0_18] : memref<3x8x16xbf16, #tpu.memory_space<vmem>>, vector<1x8x16xbf16>
    %27 = vector.shape_cast %26 : vector<1x8x16xbf16> to vector<8x16xbf16>
    %c0_19 = arith.constant 0 : index
    %c0_20 = arith.constant 0 : index
    %c0_21 = arith.constant 0 : index
    %28 = vector.load %arg7[%c0_19, %c0_20, %c0_21] : memref<3x8x1xf32, #tpu.memory_space<vmem>>, vector<1x8x1xf32>
    %29 = vector.shape_cast %28 : vector<1x8x1xf32> to vector<8x1xf32>
    %30 = arith.truncf %0 : vector<8x256xf32> to vector<8x256xbf16>
    %cst = arith.constant dense<0.000000e+00> : vector<16x256xf32>
    %31 = tpu.matmul %19, %30, %cst {dimension_numbers = #tpu.dot_dimension_numbers<[1], [0], [0], [1], [0, 0, 1, 1], [], []>} : vector<16x8xbf16>, vector<8x256xbf16>, vector<16x256xf32> -> vector<16x256xf32>
    %32 = vector.broadcast %21 : vector<16x1xf32> to vector<16x256xf32>
    %33 = arith.addf %31, %32 : vector<16x256xf32>
    %34 = arith.negf %33 : vector<16x256xf32>
    %35 = math.exp %34 : vector<16x256xf32>
    %cst_22 = arith.constant 1.000000e+00 : f32
    %36 = vector.broadcast %cst_22 : f32 to vector<16x256xf32>
    %37 = arith.addf %36, %35 : vector<16x256xf32>
    %38 = arith.divf %36, %37 : vector<16x256xf32>
    %39 = arith.mulf %33, %38 : vector<16x256xf32>
    %c1_i32_23 = arith.constant 1 : i32
    %40 = tpu.dynamic_rotate %39 by %c1_i32_23 dim 1 : vector<16x256xf32>, i32 -> vector<16x256xf32>
    %c1_i32_24 = arith.constant 1 : i32
    %41 = vector.broadcast %c1_i32_24 : i32 to vector<16x256xi32>
    %42 = arith.cmpi sge, %17, %41 : vector<16x256xi32>
    %cst_25 = arith.constant 0.000000e+00 : f32
    %43 = vector.broadcast %cst_25 : f32 to vector<16x256xf32>
    %44 = arith.select %42, %40, %43 : vector<16x256xi1>, vector<16x256xf32>
    %45 = vector.extract_strided_slice %23 {offsets = [0, 0], sizes = [16, 1], strides = [1, 1]} : vector<16x3xf32> to vector<16x1xf32>
    %46 = vector.broadcast %45 : vector<16x1xf32> to vector<16x256xf32>
    %47 = arith.mulf %44, %46 : vector<16x256xf32>
    %48 = vector.extract_strided_slice %23 {offsets = [0, 1], sizes = [16, 1], strides = [1, 1]} : vector<16x3xf32> to vector<16x1xf32>
    %49 = vector.broadcast %48 : vector<16x1xf32> to vector<16x256xf32>
    %50 = arith.mulf %39, %49 : vector<16x256xf32>
    %51 = arith.addf %47, %50 : vector<16x256xf32>
    %c255_i32 = arith.constant 255 : i32
    %52 = tpu.dynamic_rotate %39 by %c255_i32 dim 1 : vector<16x256xf32>, i32 -> vector<16x256xf32>
    %c127_i32 = arith.constant 127 : i32
    %53 = vector.broadcast %c127_i32 : i32 to vector<16x256xi32>
    %54 = arith.cmpi slt, %17, %53 : vector<16x256xi32>
    %cst_26 = arith.constant 0.000000e+00 : f32
    %55 = vector.broadcast %cst_26 : f32 to vector<16x256xf32>
    %56 = arith.select %54, %52, %55 : vector<16x256xi1>, vector<16x256xf32>
    %57 = vector.extract_strided_slice %23 {offsets = [0, 2], sizes = [16, 1], strides = [1, 1]} : vector<16x3xf32> to vector<16x1xf32>
    %58 = vector.broadcast %57 : vector<16x1xf32> to vector<16x256xf32>
    %59 = arith.mulf %56, %58 : vector<16x256xf32>
    %60 = arith.addf %51, %59 : vector<16x256xf32>
    %61 = vector.broadcast %25 : vector<16x1xf32> to vector<16x256xf32>
    %62 = arith.addf %60, %61 : vector<16x256xf32>
    %63 = arith.negf %62 : vector<16x256xf32>
    %64 = math.exp %63 : vector<16x256xf32>
    %cst_27 = arith.constant 1.000000e+00 : f32
    %65 = vector.broadcast %cst_27 : f32 to vector<16x256xf32>
    %66 = arith.addf %65, %64 : vector<16x256xf32>
    %67 = arith.divf %65, %66 : vector<16x256xf32>
    %68 = arith.mulf %62, %67 : vector<16x256xf32>
    %69 = arith.truncf %68 : vector<16x256xf32> to vector<16x256xbf16>
    %cst_28 = arith.constant dense<0.000000e+00> : vector<8x256xf32>
    %70 = tpu.matmul %27, %69, %cst_28 {dimension_numbers = #tpu.dot_dimension_numbers<[1], [0], [0], [1], [0, 0, 1, 1], [], []>} : vector<8x16xbf16>, vector<16x256xbf16>, vector<8x256xf32> -> vector<8x256xf32>
    %71 = vector.broadcast %29 : vector<8x1xf32> to vector<8x256xf32>
    %72 = arith.addf %70, %71 : vector<8x256xf32>
    %73 = arith.addf %0, %72 : vector<8x256xf32>
    %c1 = arith.constant 1 : index
    %c0_29 = arith.constant 0 : index
    %c0_30 = arith.constant 0 : index
    %74 = vector.load %arg2[%c1, %c0_29, %c0_30] : memref<3x16x8xbf16, #tpu.memory_space<vmem>>, vector<1x16x8xbf16>
    %75 = vector.shape_cast %74 : vector<1x16x8xbf16> to vector<16x8xbf16>
    %c1_31 = arith.constant 1 : index
    %c0_32 = arith.constant 0 : index
    %c0_33 = arith.constant 0 : index
    %76 = vector.load %arg3[%c1_31, %c0_32, %c0_33] : memref<3x16x1xf32, #tpu.memory_space<vmem>>, vector<1x16x1xf32>
    %77 = vector.shape_cast %76 : vector<1x16x1xf32> to vector<16x1xf32>
    %c1_34 = arith.constant 1 : index
    %c0_35 = arith.constant 0 : index
    %c0_36 = arith.constant 0 : index
    %78 = vector.load %arg4[%c1_34, %c0_35, %c0_36] : memref<3x16x3xf32, #tpu.memory_space<vmem>>, vector<1x16x3xf32>
    %79 = vector.shape_cast %78 : vector<1x16x3xf32> to vector<16x3xf32>
    %c1_37 = arith.constant 1 : index
    %c0_38 = arith.constant 0 : index
    %c0_39 = arith.constant 0 : index
    %80 = vector.load %arg5[%c1_37, %c0_38, %c0_39] : memref<3x16x1xf32, #tpu.memory_space<vmem>>, vector<1x16x1xf32>
    %81 = vector.shape_cast %80 : vector<1x16x1xf32> to vector<16x1xf32>
    %c1_40 = arith.constant 1 : index
    %c0_41 = arith.constant 0 : index
    %c0_42 = arith.constant 0 : index
    %82 = vector.load %arg6[%c1_40, %c0_41, %c0_42] : memref<3x8x16xbf16, #tpu.memory_space<vmem>>, vector<1x8x16xbf16>
    %83 = vector.shape_cast %82 : vector<1x8x16xbf16> to vector<8x16xbf16>
    %c1_43 = arith.constant 1 : index
    %c0_44 = arith.constant 0 : index
    %c0_45 = arith.constant 0 : index
    %84 = vector.load %arg7[%c1_43, %c0_44, %c0_45] : memref<3x8x1xf32, #tpu.memory_space<vmem>>, vector<1x8x1xf32>
    %85 = vector.shape_cast %84 : vector<1x8x1xf32> to vector<8x1xf32>
    %86 = arith.truncf %73 : vector<8x256xf32> to vector<8x256xbf16>
    %cst_46 = arith.constant dense<0.000000e+00> : vector<16x256xf32>
    %87 = tpu.matmul %75, %86, %cst_46 {dimension_numbers = #tpu.dot_dimension_numbers<[1], [0], [0], [1], [0, 0, 1, 1], [], []>} : vector<16x8xbf16>, vector<8x256xbf16>, vector<16x256xf32> -> vector<16x256xf32>
    %88 = vector.broadcast %77 : vector<16x1xf32> to vector<16x256xf32>
    %89 = arith.addf %87, %88 : vector<16x256xf32>
    %90 = arith.negf %89 : vector<16x256xf32>
    %91 = math.exp %90 : vector<16x256xf32>
    %cst_47 = arith.constant 1.000000e+00 : f32
    %92 = vector.broadcast %cst_47 : f32 to vector<16x256xf32>
    %93 = arith.addf %92, %91 : vector<16x256xf32>
    %94 = arith.divf %92, %93 : vector<16x256xf32>
    %95 = arith.mulf %89, %94 : vector<16x256xf32>
    %c2_i32 = arith.constant 2 : i32
    %96 = tpu.dynamic_rotate %95 by %c2_i32 dim 1 : vector<16x256xf32>, i32 -> vector<16x256xf32>
    %c2_i32_48 = arith.constant 2 : i32
    %97 = vector.broadcast %c2_i32_48 : i32 to vector<16x256xi32>
    %98 = arith.cmpi sge, %17, %97 : vector<16x256xi32>
    %cst_49 = arith.constant 0.000000e+00 : f32
    %99 = vector.broadcast %cst_49 : f32 to vector<16x256xf32>
    %100 = arith.select %98, %96, %99 : vector<16x256xi1>, vector<16x256xf32>
    %101 = vector.extract_strided_slice %79 {offsets = [0, 0], sizes = [16, 1], strides = [1, 1]} : vector<16x3xf32> to vector<16x1xf32>
    %102 = vector.broadcast %101 : vector<16x1xf32> to vector<16x256xf32>
    %103 = arith.mulf %100, %102 : vector<16x256xf32>
    %104 = vector.extract_strided_slice %79 {offsets = [0, 1], sizes = [16, 1], strides = [1, 1]} : vector<16x3xf32> to vector<16x1xf32>
    %105 = vector.broadcast %104 : vector<16x1xf32> to vector<16x256xf32>
    %106 = arith.mulf %95, %105 : vector<16x256xf32>
    %107 = arith.addf %103, %106 : vector<16x256xf32>
    %c254_i32 = arith.constant 254 : i32
    %108 = tpu.dynamic_rotate %95 by %c254_i32 dim 1 : vector<16x256xf32>, i32 -> vector<16x256xf32>
    %c126_i32 = arith.constant 126 : i32
    %109 = vector.broadcast %c126_i32 : i32 to vector<16x256xi32>
    %110 = arith.cmpi slt, %17, %109 : vector<16x256xi32>
    %cst_50 = arith.constant 0.000000e+00 : f32
    %111 = vector.broadcast %cst_50 : f32 to vector<16x256xf32>
    %112 = arith.select %110, %108, %111 : vector<16x256xi1>, vector<16x256xf32>
    %113 = vector.extract_strided_slice %79 {offsets = [0, 2], sizes = [16, 1], strides = [1, 1]} : vector<16x3xf32> to vector<16x1xf32>
    %114 = vector.broadcast %113 : vector<16x1xf32> to vector<16x256xf32>
    %115 = arith.mulf %112, %114 : vector<16x256xf32>
    %116 = arith.addf %107, %115 : vector<16x256xf32>
    %117 = vector.broadcast %81 : vector<16x1xf32> to vector<16x256xf32>
    %118 = arith.addf %116, %117 : vector<16x256xf32>
    %119 = arith.negf %118 : vector<16x256xf32>
    %120 = math.exp %119 : vector<16x256xf32>
    %cst_51 = arith.constant 1.000000e+00 : f32
    %121 = vector.broadcast %cst_51 : f32 to vector<16x256xf32>
    %122 = arith.addf %121, %120 : vector<16x256xf32>
    %123 = arith.divf %121, %122 : vector<16x256xf32>
    %124 = arith.mulf %118, %123 : vector<16x256xf32>
    %125 = arith.truncf %124 : vector<16x256xf32> to vector<16x256xbf16>
    %cst_52 = arith.constant dense<0.000000e+00> : vector<8x256xf32>
    %126 = tpu.matmul %83, %125, %cst_52 {dimension_numbers = #tpu.dot_dimension_numbers<[1], [0], [0], [1], [0, 0, 1, 1], [], []>} : vector<8x16xbf16>, vector<16x256xbf16>, vector<8x256xf32> -> vector<8x256xf32>
    %127 = vector.broadcast %85 : vector<8x1xf32> to vector<8x256xf32>
    %128 = arith.addf %126, %127 : vector<8x256xf32>
    %129 = arith.addf %73, %128 : vector<8x256xf32>
    %c2 = arith.constant 2 : index
    %c0_53 = arith.constant 0 : index
    %c0_54 = arith.constant 0 : index
    %130 = vector.load %arg2[%c2, %c0_53, %c0_54] : memref<3x16x8xbf16, #tpu.memory_space<vmem>>, vector<1x16x8xbf16>
    %131 = vector.shape_cast %130 : vector<1x16x8xbf16> to vector<16x8xbf16>
    %c2_55 = arith.constant 2 : index
    %c0_56 = arith.constant 0 : index
    %c0_57 = arith.constant 0 : index
    %132 = vector.load %arg3[%c2_55, %c0_56, %c0_57] : memref<3x16x1xf32, #tpu.memory_space<vmem>>, vector<1x16x1xf32>
    %133 = vector.shape_cast %132 : vector<1x16x1xf32> to vector<16x1xf32>
    %c2_58 = arith.constant 2 : index
    %c0_59 = arith.constant 0 : index
    %c0_60 = arith.constant 0 : index
    %134 = vector.load %arg4[%c2_58, %c0_59, %c0_60] : memref<3x16x3xf32, #tpu.memory_space<vmem>>, vector<1x16x3xf32>
    %135 = vector.shape_cast %134 : vector<1x16x3xf32> to vector<16x3xf32>
    %c2_61 = arith.constant 2 : index
    %c0_62 = arith.constant 0 : index
    %c0_63 = arith.constant 0 : index
    %136 = vector.load %arg5[%c2_61, %c0_62, %c0_63] : memref<3x16x1xf32, #tpu.memory_space<vmem>>, vector<1x16x1xf32>
    %137 = vector.shape_cast %136 : vector<1x16x1xf32> to vector<16x1xf32>
    %c2_64 = arith.constant 2 : index
    %c0_65 = arith.constant 0 : index
    %c0_66 = arith.constant 0 : index
    %138 = vector.load %arg6[%c2_64, %c0_65, %c0_66] : memref<3x8x16xbf16, #tpu.memory_space<vmem>>, vector<1x8x16xbf16>
    %139 = vector.shape_cast %138 : vector<1x8x16xbf16> to vector<8x16xbf16>
    %c2_67 = arith.constant 2 : index
    %c0_68 = arith.constant 0 : index
    %c0_69 = arith.constant 0 : index
    %140 = vector.load %arg7[%c2_67, %c0_68, %c0_69] : memref<3x8x1xf32, #tpu.memory_space<vmem>>, vector<1x8x1xf32>
    %141 = vector.shape_cast %140 : vector<1x8x1xf32> to vector<8x1xf32>
    %142 = arith.truncf %129 : vector<8x256xf32> to vector<8x256xbf16>
    %cst_70 = arith.constant dense<0.000000e+00> : vector<16x256xf32>
    %143 = tpu.matmul %131, %142, %cst_70 {dimension_numbers = #tpu.dot_dimension_numbers<[1], [0], [0], [1], [0, 0, 1, 1], [], []>} : vector<16x8xbf16>, vector<8x256xbf16>, vector<16x256xf32> -> vector<16x256xf32>
    %144 = vector.broadcast %133 : vector<16x1xf32> to vector<16x256xf32>
    %145 = arith.addf %143, %144 : vector<16x256xf32>
    %146 = arith.negf %145 : vector<16x256xf32>
    %147 = math.exp %146 : vector<16x256xf32>
    %cst_71 = arith.constant 1.000000e+00 : f32
    %148 = vector.broadcast %cst_71 : f32 to vector<16x256xf32>
    %149 = arith.addf %148, %147 : vector<16x256xf32>
    %150 = arith.divf %148, %149 : vector<16x256xf32>
    %151 = arith.mulf %145, %150 : vector<16x256xf32>
    %c4_i32 = arith.constant 4 : i32
    %152 = tpu.dynamic_rotate %151 by %c4_i32 dim 1 : vector<16x256xf32>, i32 -> vector<16x256xf32>
    %c4_i32_72 = arith.constant 4 : i32
    %153 = vector.broadcast %c4_i32_72 : i32 to vector<16x256xi32>
    %154 = arith.cmpi sge, %17, %153 : vector<16x256xi32>
    %cst_73 = arith.constant 0.000000e+00 : f32
    %155 = vector.broadcast %cst_73 : f32 to vector<16x256xf32>
    %156 = arith.select %154, %152, %155 : vector<16x256xi1>, vector<16x256xf32>
    %157 = vector.extract_strided_slice %135 {offsets = [0, 0], sizes = [16, 1], strides = [1, 1]} : vector<16x3xf32> to vector<16x1xf32>
    %158 = vector.broadcast %157 : vector<16x1xf32> to vector<16x256xf32>
    %159 = arith.mulf %156, %158 : vector<16x256xf32>
    %160 = vector.extract_strided_slice %135 {offsets = [0, 1], sizes = [16, 1], strides = [1, 1]} : vector<16x3xf32> to vector<16x1xf32>
    %161 = vector.broadcast %160 : vector<16x1xf32> to vector<16x256xf32>
    %162 = arith.mulf %151, %161 : vector<16x256xf32>
    %163 = arith.addf %159, %162 : vector<16x256xf32>
    %c252_i32 = arith.constant 252 : i32
    %164 = tpu.dynamic_rotate %151 by %c252_i32 dim 1 : vector<16x256xf32>, i32 -> vector<16x256xf32>
    %c124_i32 = arith.constant 124 : i32
    %165 = vector.broadcast %c124_i32 : i32 to vector<16x256xi32>
    %166 = arith.cmpi slt, %17, %165 : vector<16x256xi32>
    %cst_74 = arith.constant 0.000000e+00 : f32
    %167 = vector.broadcast %cst_74 : f32 to vector<16x256xf32>
    %168 = arith.select %166, %164, %167 : vector<16x256xi1>, vector<16x256xf32>
    %169 = vector.extract_strided_slice %135 {offsets = [0, 2], sizes = [16, 1], strides = [1, 1]} : vector<16x3xf32> to vector<16x1xf32>
    %170 = vector.broadcast %169 : vector<16x1xf32> to vector<16x256xf32>
    %171 = arith.mulf %168, %170 : vector<16x256xf32>
    %172 = arith.addf %163, %171 : vector<16x256xf32>
    %173 = vector.broadcast %137 : vector<16x1xf32> to vector<16x256xf32>
    %174 = arith.addf %172, %173 : vector<16x256xf32>
    %175 = arith.negf %174 : vector<16x256xf32>
    %176 = math.exp %175 : vector<16x256xf32>
    %cst_75 = arith.constant 1.000000e+00 : f32
    %177 = vector.broadcast %cst_75 : f32 to vector<16x256xf32>
    %178 = arith.addf %177, %176 : vector<16x256xf32>
    %179 = arith.divf %177, %178 : vector<16x256xf32>
    %180 = arith.mulf %174, %179 : vector<16x256xf32>
    %181 = arith.truncf %180 : vector<16x256xf32> to vector<16x256xbf16>
    %cst_76 = arith.constant dense<0.000000e+00> : vector<8x256xf32>
    %182 = tpu.matmul %139, %181, %cst_76 {dimension_numbers = #tpu.dot_dimension_numbers<[1], [0], [0], [1], [0, 0, 1, 1], [], []>} : vector<8x16xbf16>, vector<16x256xbf16>, vector<8x256xf32> -> vector<8x256xf32>
    %183 = vector.broadcast %141 : vector<8x1xf32> to vector<8x256xf32>
    %184 = arith.addf %182, %183 : vector<8x256xf32>
    %185 = arith.addf %129, %184 : vector<8x256xf32>
    %c0_77 = arith.constant 0 : index
    %c0_78 = arith.constant 0 : index
    %186 = vector.load %arg8[%c0_77, %c0_78] : memref<8x256xf32, #tpu.memory_space<vmem>>, vector<8x256xf32>
    tpu.vector_store %arg8[%c0_77, %c0_78], %185 {strides = array<i32>} : memref<8x256xf32, #tpu.memory_space<vmem>>, vector<8x256xf32>,
    return
  }
  func.func @transform_0(%arg0: i32) -> (i32, i32) {
    %c0_i32 = arith.constant 0 : i32
    %c0_i32_0 = arith.constant 0 : i32
    return %c0_i32, %arg0 : i32, i32
  }
  func.func @transform_1(%arg0: i32) -> (i32, i32, i32) {
    %c0_i32 = arith.constant 0 : i32
    %c0_i32_0 = arith.constant 0 : i32
    %c0_i32_1 = arith.constant 0 : i32
    %c0_i32_2 = arith.constant 0 : i32
    return %c0_i32, %c0_i32_0, %c0_i32_1 : i32, i32, i32
  }
  func.func @transform_2(%arg0: i32) -> (i32, i32, i32) {
    %c0_i32 = arith.constant 0 : i32
    %c0_i32_0 = arith.constant 0 : i32
    %c0_i32_1 = arith.constant 0 : i32
    %c0_i32_2 = arith.constant 0 : i32
    return %c0_i32, %c0_i32_0, %c0_i32_1 : i32, i32, i32
  }
  func.func @transform_3(%arg0: i32) -> (i32, i32, i32) {
    %c0_i32 = arith.constant 0 : i32
    %c0_i32_0 = arith.constant 0 : i32
    %c0_i32_1 = arith.constant 0 : i32
    %c0_i32_2 = arith.constant 0 : i32
    return %c0_i32, %c0_i32_0, %c0_i32_1 : i32, i32, i32
  }
  func.func @transform_4(%arg0: i32) -> (i32, i32, i32) {
    %c0_i32 = arith.constant 0 : i32
    %c0_i32_0 = arith.constant 0 : i32
    %c0_i32_1 = arith.constant 0 : i32
    %c0_i32_2 = arith.constant 0 : i32
    return %c0_i32, %c0_i32_0, %c0_i32_1 : i32, i32, i32
  }
  func.func @transform_5(%arg0: i32) -> (i32, i32, i32) {
    %c0_i32 = arith.constant 0 : i32
    %c0_i32_0 = arith.constant 0 : i32
    %c0_i32_1 = arith.constant 0 : i32
    %c0_i32_2 = arith.constant 0 : i32
    return %c0_i32, %c0_i32_0, %c0_i32_1 : i32, i32, i32
  }
  func.func @transform_6(%arg0: i32) -> (i32, i32, i32) {
    %c0_i32 = arith.constant 0 : i32
    %c0_i32_0 = arith.constant 0 : i32
    %c0_i32_1 = arith.constant 0 : i32
    %c0_i32_2 = arith.constant 0 : i32
    return %c0_i32, %c0_i32_0, %c0_i32_1 : i32, i32, i32
  }
  func.func @transform_7(%arg0: i32) -> (i32, i32) {
    %c0_i32 = arith.constant 0 : i32
    %c0_i32_0 = arith.constant 0 : i32
    return %c0_i32, %arg0 : i32, i32
  }
}

</mosaic_0001>

<llo_original>
// kernel: tpu_custom_call.1
$region0: #{tpu_custom_call.1}
  #allocation0 [shape = 'u32[]', space=smem, size = 0x4, offset = 0x4, fixed_abs, tag = 'smem constant byte address 0x4 - core index']
  #allocation1 [shape = 'u32[72,128]{1,0:T(1,128)}', space=vmem, size = 0x9000, scoped, tag = 'internal scratch']
  %s0 = inlined_call_operand.vmem [shape: f32[8,256], index: 0, kind: input, shape index: {}]
  %s1 = inlined_call_operand.vmem [shape: bf16[3,16,8], index: 1, kind: input, shape index: {}]
  %s2 = inlined_call_operand.vmem [shape: f32[3,16,1], index: 2, kind: input, shape index: {}]
  %s3 = inlined_call_operand.vmem [shape: f32[3,16,3], index: 3, kind: input, shape index: {}]
  %s4 = inlined_call_operand.vmem [shape: f32[3,16,1], index: 4, kind: input, shape index: {}]
  %s5 = inlined_call_operand.vmem [shape: bf16[3,8,16], index: 5, kind: input, shape index: {}]
  %s6 = inlined_call_operand.vmem [shape: f32[3,8,1], index: 6, kind: input, shape index: {}]
  %s7 = inlined_call_operand.hbm [shape: f32[8,256], index: 7, kind: output, shape index: {}]
  %s8 = sld [smem:[#allocation0]]
  $region38: #{tpu_custom_call.1} parent=0
    _
  %s10 = ssub.s32 1, %s8
  %s11 = scalar_select 0, %s10, %s8
  $region1: #{tpu_custom_call.1} parent=0
    #allocation2 [shape = 'u8[8192]{0}', space=vmem, size = 0x2000, scoped, tag = 'output window, operand 0, single buffered']
    #allocation3 [shape = 's32[1]{0}', space=sflag, size = 0x4, scoped, tag = 'scoped memory for tpu_custom_call.1']
    %12 = vsyncpa [#allocation3], 0
    // Predicated region
    $region2: #{tpu_custom_call.1} parent=1 // pred_check
      _
    $region3: #{tpu_custom_call.1} parent=1 // pred_check_branch
      %14 = sbr.rel (0) target = $region5
    $region4: #{tpu_custom_call.1} parent=1 // pred_region
      _
    $region5: #{tpu_custom_call.1} parent=1 // pred_fallthru
      _
    // Predicated region
    $region6: #{tpu_custom_call.1} parent=1 // pred_check
      _
    $region7: #{tpu_custom_call.1} parent=1 // pred_check_branch
      %16 = sbr.rel (0) target = $region9
    $region8: #{tpu_custom_call.1} parent=1 // pred_region
      _
    $region9: #{tpu_custom_call.1} parent=1 // pred_fallthru
      _
    // Predicated region
    $region10: #{tpu_custom_call.1} parent=1 // pred_check
      _
    $region11: #{tpu_custom_call.1} parent=1 // pred_check_branch
      %18 = sbr.rel (0) target = $region13
    $region12: #{tpu_custom_call.1} parent=1 // pred_region
      _
    $region13: #{tpu_custom_call.1} parent=1 // pred_fallthru
      _
    // Predicated region
    $region14: #{tpu_custom_call.1} parent=1 // pred_check
      _
    $region15: #{tpu_custom_call.1} parent=1 // pred_check_branch
      %20 = sbr.rel (0) target = $region17
    $region16: #{tpu_custom_call.1} parent=1 // pred_region
      _
    $region17: #{tpu_custom_call.1} parent=1 // pred_fallthru
      _
    // Predicated region
    $region18: #{tpu_custom_call.1} parent=1 // pred_check
      _
    $region19: #{tpu_custom_call.1} parent=1 // pred_check_branch
      %22 = sbr.rel (0) target = $region21
    $region20: #{tpu_custom_call.1} parent=1 // pred_region
      _
    $region21: #{tpu_custom_call.1} parent=1 // pred_fallthru
      _
    // Predicated region
    $region22: #{tpu_custom_call.1} parent=1 // pred_check
      _
    $region23: #{tpu_custom_call.1} parent=1 // pred_check_branch
      %24 = sbr.rel (0) target = $region25
    $region24: #{tpu_custom_call.1} parent=1 // pred_region
      _
    $region25: #{tpu_custom_call.1} parent=1 // pred_fallthru
      _
    // Predicated region
    $region26: #{tpu_custom_call.1} parent=1 // pred_check
      _
    $region27: #{tpu_custom_call.1} parent=1 // pred_check_branch
      %26 = sbr.rel (0) target = $region29
    $region28: #{tpu_custom_call.1} parent=1 // pred_region
      _
    $region29: #{tpu_custom_call.1} parent=1 // pred_fallthru
      _
    %v28 = vld [vmem:[%s0] sm:$0xff]
    %v29 = vld [vmem:[%s0 + $0x8] sm:$0xff]
    %v30 = vlaneseq
    %v31 = vand.u32 %v30, 127
    %v32 = vadd.s32 %v31, 128
    %vm33 = vcmp.lt.s32.totalorder %v31, 0
    %v34 = vsub.s32 0, %v31
    %v35 = vsel %vm33, %v34, %v31
    %v36 = vshrl.u32 %v35, 7
    %v37 = vand.u32 %v35, 127
    %v38 = vsub.s32 0, %v37
    %v39 = vsel %vm33, %v38, %v37
    %vm40 = vcmp.lt.s32.totalorder %v32, 0
    %v41 = vsub.s32 0, %v32
    %v42 = vsel %vm40, %v41, %v32
    %v43 = vshrl.u32 %v42, 7
    %v44 = vand.u32 %v42, 127
    %v45 = vsub.s32 0, %v44
    %v46 = vsel %vm40, %v45, %v44
    %vm47 = vcmp.ne.s32.totalorder %v39, 0
    %vm48 = vcmp.ne.s32.totalorder %v46, 0
    %vm49 = vcmp.lt.s32.totalorder %v39, 0
    %vm50 = vcmp.lt.s32.totalorder %v46, 0
    %vm51 = vmand %vm49, %vm47
    %vm52 = vmand %vm50, %vm48
    %v53 = vadd.s32 %v39, 128
    %v54 = vadd.s32 %v46, 128
    %v55 = vsel %vm51, %v53, %v39
    %v56 = vsel %vm52, %v54, %v46
    %v57 = vld [vmem:[%s1] sm:$0xf]
    %v58 = vld [vmem:[%s1 + $0x4] sm:$0xf]
    %v59 = vld [vmem:[%s2] sm:$0xff]
    %v60 = vld [vmem:[%s2 + $0x8] sm:$0xff]
    %v61 = vld [vmem:[%s3] sm:$0xff]
    %v62 = vld [vmem:[%s3 + $0x8] sm:$0xff]
    %v63 = vld [vmem:[%s4] sm:$0xff]
    %v64 = vld [vmem:[%s4 + $0x8] sm:$0xff]
    %v65 = vld [vmem:[%s5] sm:$0xf]
    %v66 = vld [vmem:[%s6] sm:$0xff]
    %v67 = vpack.c.bf16 %v28, %v28
    %v68 = vpack.c.bf16 %v29, %v29
    %70 = vset.pattern.permute.xlu0 0
    %71 = vperm.xlu0 %70, %v59
    %v72 = vpop.permute.xlu0 %71
    %75 = vset.pattern.permute.xlu0 0
    %76 = vperm.xlu0 %75, %v60
    %v77 = vpop.permute.xlu0 %76
    %v81 = vunpack.c.l.b16 %v57
    %v82 = vunpack.c.l.b16 %v58
    %v83 = vpack.c.b16 %v82, %v81
    %vm84 = vcmask 64512
    %v86 = vsel %vm84, %v83, 0
    %vm88 = vcmask 1043456
    %v90 = vsel %vm88, %v67, 0
    %v93 = vsel %vm88, %v68, 0
    %95 = vmatpush.bf16.msra.mxu0 0
    %96 = vmatpush.bf16.msra.mxu0 0
    %97 = vmatpush.bf16.msra.mxu0 0
    %98 = vmatpush.bf16.msra.mxu0 0
    %99 = vmatpush.bf16.msra.mxu0 0
    %100 = vmatpush.bf16.msra.mxu0 0
    %101 = vmatpush.bf16.msra.mxu0 0
    %102 = vmatpush.bf16.msra.mxu0 %v90
    %103 = vmatmul.bf16.gmra.mxu0 %v86
    %v104 = vpop.f32.mrf.mxu0
    %v105 = vadd.f32 %v72, %v104
    %v106 = vpop.f32.mrf.mxu0
    %v107 = vadd.f32 %v77, %v106
    %108 = vdwg.mxu0
    %109 = vmatpush.bf16.msra.mxu0 0
    %110 = vmatpush.bf16.msra.mxu0 0
    %111 = vmatpush.bf16.msra.mxu0 0
    %112 = vmatpush.bf16.msra.mxu0 0
    %113 = vmatpush.bf16.msra.mxu0 0
    %114 = vmatpush.bf16.msra.mxu0 0
    %115 = vmatpush.bf16.msra.mxu0 0
    %116 = vmatpush.bf16.msra.mxu0 %v93
    %117 = vmatmul.bf16.gmra.mxu0 %v86
    %v118 = vpop.f32.mrf.mxu0
    %v119 = vadd.f32 %v72, %v118
    %v120 = vpop.f32.mrf.mxu0
    %v121 = vadd.f32 %v77, %v120
    %122 = vdwg.mxu0
    %v123 = vxor.u32 %v105, 2147483648
    %v124 = vxor.u32 %v119, 2147483648
    %v125 = vxor.u32 %v107, 2147483648
    %v126 = vxor.u32 %v121, 2147483648
    %v127 = vmul.f32 %v123, 1.442695
    %v128 = vpow.pop %v127
    %v129 = vmul.f32 %v124, 1.442695
    %v130 = vpow.pop %v129
    %v131 = vmul.f32 %v125, 1.442695
    %v132 = vpow.pop %v131
    %v133 = vmul.f32 %v126, 1.442695
    %v134 = vpow.pop %v133
    %v135 = vadd.f32 %v128, 1.0
    %v136 = vadd.f32 %v130, 1.0
    %v137 = vadd.f32 %v132, 1.0
    %v138 = vadd.f32 %v134, 1.0
    %v139 = vrcp.pop %v135
    %v140 = vmul.f32 %v135, %v139
    %v141 = vsub.f32 1.0, %v140
    %v142 = vmul.f32 %v139, %v141
    %v143 = vadd.f32 %v139, %v142
    %vm144 = vweird.f32 %v135
    %vm145 = vweird.f32 %v139
    %vm146 = vmor %vm144, %vm145
    %v147 = vsel %vm146, %v139, %v143
    %v148 = vand.u32 2147483647, %v135
    %vm149 = vcmp.eq.f32.partialorder %v148, 8.507059e+37
    %v150 = vand.u32 %v135, 2147483648
    %v151 = vor.u32 1.1754944e-38, %v150
    %v152 = vsel %vm149, %v151, %v147
    %v153 = vmul.f32 1.0, %v152
    %v154 = vrcp.pop %v136
    %v155 = vmul.f32 %v136, %v154
    %v156 = vsub.f32 1.0, %v155
    %v157 = vmul.f32 %v154, %v156
    %v158 = vadd.f32 %v154, %v157
    %vm159 = vweird.f32 %v136
    %vm160 = vweird.f32 %v154
    %vm161 = vmor %vm159, %vm160
    %v162 = vsel %vm161, %v154, %v158
    %v163 = vand.u32 2147483647, %v136
    %vm164 = vcmp.eq.f32.partialorder %v163, 8.507059e+37
    %v165 = vand.u32 %v136, 2147483648
    %v166 = vor.u32 1.1754944e-38, %v165
    %v167 = vsel %vm164, %v166, %v162
    %v168 = vmul.f32 1.0, %v167
    %v169 = vrcp.pop %v137
    %v170 = vmul.f32 %v137, %v169
    %v171 = vsub.f32 1.0, %v170
    %v172 = vmul.f32 %v169, %v171
    %v173 = vadd.f32 %v169, %v172
    %vm174 = vweird.f32 %v137
    %vm175 = vweird.f32 %v169
    %vm176 = vmor %vm174, %vm175
    %v177 = vsel %vm176, %v169, %v173
    %v178 = vand.u32 2147483647, %v137
    %vm179 = vcmp.eq.f32.partialorder %v178, 8.507059e+37
    %v180 = vand.u32 %v137, 2147483648
    %v181 = vor.u32 1.1754944e-38, %v180
    %v182 = vsel %vm179, %v181, %v177
    %v183 = vmul.f32 1.0, %v182
    %v184 = vrcp.pop %v138
    %v185 = vmul.f32 %v138, %v184
    %v186 = vsub.f32 1.0, %v185
    %v187 = vmul.f32 %v184, %v186
    %v188 = vadd.f32 %v184, %v187
    %vm189 = vweird.f32 %v138
    %vm190 = vweird.f32 %v184
    %vm191 = vmor %vm189, %vm190
    %v192 = vsel %vm191, %v184, %v188
    %v193 = vand.u32 2147483647, %v138
    %vm194 = vcmp.eq.f32.partialorder %v193, 8.507059e+37
    %v195 = vand.u32 %v138, 2147483648
    %v196 = vor.u32 1.1754944e-38, %v195
    %v197 = vsel %vm194, %v196, %v192
    %v198 = vmul.f32 1.0, %v197
    %v199 = vmul.f32 %v105, %v153
    %v200 = vmul.f32 %v119, %v168
    %v201 = vmul.f32 %v107, %v183
    %v202 = vmul.f32 %v121, %v198
    %203 = vrot.lane.b32.xlu0 %v199, 1
    %v204 = vpop.permute.xlu0 %203
    %205 = vrot.lane.b32.xlu0 %v201, 1
    %v206 = vpop.permute.xlu0 %205
    %207 = vrot.lane.b32.xlu0 %v200, 1
    %v208 = vpop.permute.xlu0 %207
    %209 = vrot.lane.b32.xlu0 %v202, 1
    %v210 = vpop.permute.xlu0 %209
    %vm211 = vcmp.lt.s32.totalorder %v31, 1
    %v212 = vsel %vm211, %v204, %v208
    %v213 = vsel %vm211, %v206, %v210
    %v214 = vsel %vm211, %v208, %v204
    %v215 = vsel %vm211, %v210, %v206
    %vm216 = vcmp.ge.s32.totalorder %v55, 1
    %vm217 = vcmp.ge.s32.totalorder %v56, 1
    %v218 = vsel %vm216, %v214, 0.0
    %v219 = vsel %vm217, %v212, 0.0
    %v220 = vsel %vm216, %v215, 0.0
    %v221 = vsel %vm217, %v213, 0.0
    %223 = vset.pattern.permute.xlu0 0
    %224 = vperm.xlu0 %223, %v61
    %v225 = vpop.permute.xlu0 %224
    %228 = vset.pattern.permute.xlu0 0
    %229 = vperm.xlu0 %228, %v62
    %v230 = vpop.permute.xlu0 %229
    %v232 = vmul.f32 %v218, %v225
    %v233 = vmul.f32 %v219, %v225
    %v234 = vmul.f32 %v220, %v230
    %v235 = vmul.f32 %v221, %v230
    %236 = vset.pattern.permute.xlu0 1
    %237 = vperm.xlu0 %236, %v61
    %v238 = vpop.permute.xlu0 %237
    %240 = vset.pattern.permute.xlu0 1
    %241 = vperm.xlu0 %240, %v62
    %v242 = vpop.permute.xlu0 %241
    %v244 = vmul.f32 %v199, %v238
    %v245 = vmul.f32 %v200, %v238
    %v246 = vmul.f32 %v201, %v242
    %v247 = vmul.f32 %v202, %v242
    %v248 = vadd.f32 %v232, %v244
    %v249 = vadd.f32 %v233, %v245
    %v250 = vadd.f32 %v234, %v246
    %v251 = vadd.f32 %v235, %v247
    %252 = vrot.lane.b32.xlu0 %v199, 127
    %v253 = vpop.permute.xlu0 %252
    %254 = vrot.lane.b32.xlu0 %v201, 127
    %v255 = vpop.permute.xlu0 %254
    %256 = vrot.lane.b32.xlu0 %v200, 127
    %v257 = vpop.permute.xlu0 %256
    %258 = vrot.lane.b32.xlu0 %v202, 127
    %v259 = vpop.permute.xlu0 %258
    %vm260 = vcmp.lt.s32.totalorder %v31, 127
    %v261 = vsel %vm260, %v253, %v257
    %v262 = vsel %vm260, %v255, %v259
    %v263 = vsel %vm260, %v257, %v253
    %v264 = vsel %vm260, %v259, %v255
    %vm265 = vcmp.lt.s32.totalorder %v55, 127
    %vm266 = vcmp.lt.s32.totalorder %v56, 127
    %v267 = vsel %vm265, %v261, 0.0
    %v268 = vsel %vm266, %v263, 0.0
    %v269 = vsel %vm265, %v262, 0.0
    %v270 = vsel %vm266, %v264, 0.0
    %271 = vset.pattern.permute.xlu0 2
    %272 = vperm.xlu0 %271, %v61
    %v273 = vpop.permute.xlu0 %272
    %275 = vset.pattern.permute.xlu0 2
    %276 = vperm.xlu0 %275, %v62
    %v277 = vpop.permute.xlu0 %276
    %v279 = vmul.f32 %v267, %v273
    %v280 = vmul.f32 %v268, %v273
    %v281 = vmul.f32 %v269, %v277
    %v282 = vmul.f32 %v270, %v277
    %v283 = vadd.f32 %v248, %v279
    %v284 = vadd.f32 %v249, %v280
    %v285 = vadd.f32 %v250, %v281
    %v286 = vadd.f32 %v251, %v282
    %288 = vset.pattern.permute.xlu0 0
    %289 = vperm.xlu0 %288, %v63
    %v290 = vpop.permute.xlu0 %289
    %293 = vset.pattern.permute.xlu0 0
    %294 = vperm.xlu0 %293, %v64
    %v295 = vpop.permute.xlu0 %294
    %v297 = vadd.f32 %v283, %v290
    %v298 = vadd.f32 %v284, %v290
    %v299 = vadd.f32 %v285, %v295
    %v300 = vadd.f32 %v286, %v295
    %v301 = vxor.u32 %v297, 2147483648
    %v302 = vxor.u32 %v298, 2147483648
    %v303 = vxor.u32 %v299, 2147483648
    %v304 = vxor.u32 %v300, 2147483648
    %v305 = vmul.f32 %v301, 1.442695
    %v306 = vpow.pop %v305
    %v307 = vmul.f32 %v302, 1.442695
    %v308 = vpow.pop %v307
    %v309 = vmul.f32 %v303, 1.442695
    %v310 = vpow.pop %v309
    %v311 = vmul.f32 %v304, 1.442695
    %v312 = vpow.pop %v311
    %v313 = vadd.f32 %v306, 1.0
    %v314 = vadd.f32 %v308, 1.0
    %v315 = vadd.f32 %v310, 1.0
    %v316 = vadd.f32 %v312, 1.0
    %v317 = vrcp.pop %v313
    %v318 = vmul.f32 %v313, %v317
    %v319 = vsub.f32 1.0, %v318
    %v320 = vmul.f32 %v317, %v319
    %v321 = vadd.f32 %v317, %v320
    %vm322 = vweird.f32 %v313
    %vm323 = vweird.f32 %v317
    %vm324 = vmor %vm322, %vm323
    %v325 = vsel %vm324, %v317, %v321
    %v326 = vand.u32 2147483647, %v313
    %vm327 = vcmp.eq.f32.partialorder %v326, 8.507059e+37
    %v328 = vand.u32 %v313, 2147483648
    %v329 = vor.u32 1.1754944e-38, %v328
    %v330 = vsel %vm327, %v329, %v325
    %v331 = vmul.f32 1.0, %v330
    %v332 = vrcp.pop %v314
    %v333 = vmul.f32 %v314, %v332
    %v334 = vsub.f32 1.0, %v333
    %v335 = vmul.f32 %v332, %v334
    %v336 = vadd.f32 %v332, %v335
    %vm337 = vweird.f32 %v314
    %vm338 = vweird.f32 %v332
    %vm339 = vmor %vm337, %vm338
    %v340 = vsel %vm339, %v332, %v336
    %v341 = vand.u32 2147483647, %v314
    %vm342 = vcmp.eq.f32.partialorder %v341, 8.507059e+37
    %v343 = vand.u32 %v314, 2147483648
    %v344 = vor.u32 1.1754944e-38, %v343
    %v345 = vsel %vm342, %v344, %v340
    %v346 = vmul.f32 1.0, %v345
    %v347 = vrcp.pop %v315
    %v348 = vmul.f32 %v315, %v347
    %v349 = vsub.f32 1.0, %v348
    %v350 = vmul.f32 %v347, %v349
    %v351 = vadd.f32 %v347, %v350
    %vm352 = vweird.f32 %v315
    %vm353 = vweird.f32 %v347
    %vm354 = vmor %vm352, %vm353
    %v355 = vsel %vm354, %v347, %v351
    %v356 = vand.u32 2147483647, %v315
    %vm357 = vcmp.eq.f32.partialorder %v356, 8.507059e+37
    %v358 = vand.u32 %v315, 2147483648
    %v359 = vor.u32 1.1754944e-38, %v358
    %v360 = vsel %vm357, %v359, %v355
    %v361 = vmul.f32 1.0, %v360
    %v362 = vrcp.pop %v316
    %v363 = vmul.f32 %v316, %v362
    %v364 = vsub.f32 1.0, %v363
    %v365 = vmul.f32 %v362, %v364
    %v366 = vadd.f32 %v362, %v365
    %vm367 = vweird.f32 %v316
    %vm368 = vweird.f32 %v362
    %vm369 = vmor %vm367, %vm368
    %v370 = vsel %vm369, %v362, %v366
    %v371 = vand.u32 2147483647, %v316
    %vm372 = vcmp.eq.f32.partialorder %v371, 8.507059e+37
    %v373 = vand.u32 %v316, 2147483648
    %v374 = vor.u32 1.1754944e-38, %v373
    %v375 = vsel %vm372, %v374, %v370
    %v376 = vmul.f32 1.0, %v375
    %v377 = vmul.f32 %v297, %v331
    %v378 = vmul.f32 %v298, %v346
    %v379 = vmul.f32 %v299, %v361
    %v380 = vmul.f32 %v300, %v376
    %v381 = vpack.c.bf16 %v379, %v377
    %v382 = vpack.c.bf16 %v380, %v378
    %384 = vset.pattern.permute.xlu0 0
    %385 = vperm.xlu0 %384, %v66
    %v386 = vpop.permute.xlu0 %385
    %vm388 = vcmask 130048
    %v390 = vsel %vm388, %v65, 0
    %392 = vmatpush.bf16.msra.mxu0 0
    %393 = vmatpush.bf16.msra.mxu0 0
    %394 = vmatpush.bf16.msra.mxu0 0
    %395 = vmatpush.bf16.msra.mxu0 0
    %396 = vmatpush.bf16.msra.mxu0 0
    %397 = vmatpush.bf16.msra.mxu0 0
    %398 = vmatpush.bf16.msra.mxu0 0
    %399 = vmatpush.bf16.msra.mxu0 %v381
    %400 = vmatmul.bf16.gmra.mxu0 %v390
    %v401 = vpop.f32.mrf.mxu0
    %v402 = vadd.f32 %v386, %v401
    %v403 = vpop.f32.mrf.mxu0
    %404 = vdwg.mxu0
    %405 = vmatpush.bf16.msra.mxu0 0
    %406 = vmatpush.bf16.msra.mxu0 0
    %407 = vmatpush.bf16.msra.mxu0 0
    %408 = vmatpush.bf16.msra.mxu0 0
    %409 = vmatpush.bf16.msra.mxu0 0
    %410 = vmatpush.bf16.msra.mxu0 0
    %411 = vmatpush.bf16.msra.mxu0 0
    %412 = vmatpush.bf16.msra.mxu0 %v382
    %413 = vmatmul.bf16.gmra.mxu0 %v390
    %v414 = vpop.f32.mrf.mxu0
    %v415 = vadd.f32 %v386, %v414
    %v416 = vpop.f32.mrf.mxu0
    %417 = vdwg.mxu0
    %v418 = vadd.f32 %v28, %v402
    %v419 = vadd.f32 %v29, %v415
    %s420 = scalar_lea.vmem %s1, 8
    %v421 = vld [vmem:[%s420] sm:$0xf]
    %v422 = vld [vmem:[%s420 + $0x4] sm:$0xf]
    %s423 = scalar_lea.vmem %s2, 16
    %v424 = vld [vmem:[%s423] sm:$0xff]
    %v425 = vld [vmem:[%s423 + $0x8] sm:$0xff]
    %s426 = scalar_lea.vmem %s3, 16
    %v427 = vld [vmem:[%s426] sm:$0xff]
    %v428 = vld [vmem:[%s426 + $0x8] sm:$0xff]
    %s429 = scalar_lea.vmem %s4, 16
    %v430 = vld [vmem:[%s429] sm:$0xff]
    %v431 = vld [vmem:[%s429 + $0x8] sm:$0xff]
    %s432 = scalar_lea.vmem %s5, 4
    %v433 = vld [vmem:[%s432] sm:$0xf]
    %s434 = scalar_lea.vmem %s6, 8
    %v435 = vld [vmem:[%s434] sm:$0xff]
    %v436 = vpack.c.bf16 %v418, %v418
    %v437 = vpack.c.bf16 %v419, %v419
    %439 = vset.pattern.permute.xlu0 0
    %440 = vperm.xlu0 %439, %v424
    %v441 = vpop.permute.xlu0 %440
    %444 = vset.pattern.permute.xlu0 0
    %445 = vperm.xlu0 %444, %v425
    %v446 = vpop.permute.xlu0 %445
    %v450 = vunpack.c.l.b16 %v421
    %v451 = vunpack.c.l.b16 %v422
    %v452 = vpack.c.b16 %v451, %v450
    %v454 = vsel %vm84, %v452, 0
    %v457 = vsel %vm88, %v436, 0
    %v460 = vsel %vm88, %v437, 0
    %462 = vmatpush.bf16.msra.mxu0 0
    %463 = vmatpush.bf16.msra.mxu0 0
    %464 = vmatpush.bf16.msra.mxu0 0
    %465 = vmatpush.bf16.msra.mxu0 0
    %466 = vmatpush.bf16.msra.mxu0 0
    %467 = vmatpush.bf16.msra.mxu0 0
    %468 = vmatpush.bf16.msra.mxu0 0
    %469 = vmatpush.bf16.msra.mxu0 %v457
    %470 = vmatmul.bf16.gmra.mxu0 %v454
    %v471 = vpop.f32.mrf.mxu0
    %v472 = vadd.f32 %v441, %v471
    %v473 = vpop.f32.mrf.mxu0
    %v474 = vadd.f32 %v446, %v473
    %475 = vdwg.mxu0
    %476 = vmatpush.bf16.msra.mxu0 0
    %477 = vmatpush.bf16.msra.mxu0 0
    %478 = vmatpush.bf16.msra.mxu0 0
    %479 = vmatpush.bf16.msra.mxu0 0
    %480 = vmatpush.bf16.msra.mxu0 0
    %481 = vmatpush.bf16.msra.mxu0 0
    %482 = vmatpush.bf16.msra.mxu0 0
    %483 = vmatpush.bf16.msra.mxu0 %v460
    %484 = vmatmul.bf16.gmra.mxu0 %v454
    %v485 = vpop.f32.mrf.mxu0
    %v486 = vadd.f32 %v441, %v485
    %v487 = vpop.f32.mrf.mxu0
    %v488 = vadd.f32 %v446, %v487
    %489 = vdwg.mxu0
    %v490 = vxor.u32 %v472, 2147483648
    %v491 = vxor.u32 %v486, 2147483648
    %v492 = vxor.u32 %v474, 2147483648
    %v493 = vxor.u32 %v488, 2147483648
    %v494 = vmul.f32 %v490, 1.442695
    %v495 = vpow.pop %v494
    %v496 = vmul.f32 %v491, 1.442695
    %v497 = vpow.pop %v496
    %v498 = vmul.f32 %v492, 1.442695
    %v499 = vpow.pop %v498
    %v500 = vmul.f32 %v493, 1.442695
    %v501 = vpow.pop %v500
    %v502 = vadd.f32 %v495, 1.0
    %v503 = vadd.f32 %v497, 1.0
    %v504 = vadd.f32 %v499, 1.0
    %v505 = vadd.f32 %v501, 1.0
    %v506 = vrcp.pop %v502
    %v507 = vmul.f32 %v502, %v506
    %v508 = vsub.f32 1.0, %v507
    %v509 = vmul.f32 %v506, %v508
    %v510 = vadd.f32 %v506, %v509
    %vm511 = vweird.f32 %v502
    %vm512 = vweird.f32 %v506
    %vm513 = vmor %vm511, %vm512
    %v514 = vsel %vm513, %v506, %v510
    %v515 = vand.u32 2147483647, %v502
    %vm516 = vcmp.eq.f32.partialorder %v515, 8.507059e+37
    %v517 = vand.u32 %v502, 2147483648
    %v518 = vor.u32 1.1754944e-38, %v517
    %v519 = vsel %vm516, %v518, %v514
    %v520 = vmul.f32 1.0, %v519
    %v521 = vrcp.pop %v503
    %v522 = vmul.f32 %v503, %v521
    %v523 = vsub.f32 1.0, %v522
    %v524 = vmul.f32 %v521, %v523
    %v525 = vadd.f32 %v521, %v524
    %vm526 = vweird.f32 %v503
    %vm527 = vweird.f32 %v521
    %vm528 = vmor %vm526, %vm527
    %v529 = vsel %vm528, %v521, %v525
    %v530 = vand.u32 2147483647, %v503
    %vm531 = vcmp.eq.f32.partialorder %v530, 8.507059e+37
    %v532 = vand.u32 %v503, 2147483648
    %v533 = vor.u32 1.1754944e-38, %v532
    %v534 = vsel %vm531, %v533, %v529
    %v535 = vmul.f32 1.0, %v534
    %v536 = vrcp.pop %v504
    %v537 = vmul.f32 %v504, %v536
    %v538 = vsub.f32 1.0, %v537
    %v539 = vmul.f32 %v536, %v538
    %v540 = vadd.f32 %v536, %v539
    %vm541 = vweird.f32 %v504
    %vm542 = vweird.f32 %v536
    %vm543 = vmor %vm541, %vm542
    %v544 = vsel %vm543, %v536, %v540
    %v545 = vand.u32 2147483647, %v504
    %vm546 = vcmp.eq.f32.partialorder %v545, 8.507059e+37
    %v547 = vand.u32 %v504, 2147483648
    %v548 = vor.u32 1.1754944e-38, %v547
    %v549 = vsel %vm546, %v548, %v544
    %v550 = vmul.f32 1.0, %v549
    %v551 = vrcp.pop %v505
    %v552 = vmul.f32 %v505, %v551
    %v553 = vsub.f32 1.0, %v552
    %v554 = vmul.f32 %v551, %v553
    %v555 = vadd.f32 %v551, %v554
    %vm556 = vweird.f32 %v505
    %vm557 = vweird.f32 %v551
    %vm558 = vmor %vm556, %vm557
    %v559 = vsel %vm558, %v551, %v555
    %v560 = vand.u32 2147483647, %v505
    %vm561 = vcmp.eq.f32.partialorder %v560, 8.507059e+37
    %v562 = vand.u32 %v505, 2147483648
    %v563 = vor.u32 1.1754944e-38, %v562
    %v564 = vsel %vm561, %v563, %v559
    %v565 = vmul.f32 1.0, %v564
    %v566 = vmul.f32 %v472, %v520
    %v567 = vmul.f32 %v486, %v535
    %v568 = vmul.f32 %v474, %v550
    %v569 = vmul.f32 %v488, %v565
    %570 = vrot.lane.b32.xlu0 %v566, 2
    %v571 = vpop.permute.xlu0 %570
    %572 = vrot.lane.b32.xlu0 %v568, 2
    %v573 = vpop.permute.xlu0 %572
    %574 = vrot.lane.b32.xlu0 %v567, 2
    %v575 = vpop.permute.xlu0 %574
    %576 = vrot.lane.b32.xlu0 %v569, 2
    %v577 = vpop.permute.xlu0 %576
    %vm578 = vcmp.lt.s32.totalorder %v31, 2
    %v579 = vsel %vm578, %v571, %v575
    %v580 = vsel %vm578, %v573, %v577
    %v581 = vsel %vm578, %v575, %v571
    %v582 = vsel %vm578, %v577, %v573
    %vm583 = vcmp.ge.s32.totalorder %v55, 2
    %vm584 = vcmp.ge.s32.totalorder %v56, 2
    %v585 = vsel %vm583, %v581, 0.0
    %v586 = vsel %vm584, %v579, 0.0
    %v587 = vsel %vm583, %v582, 0.0
    %v588 = vsel %vm584, %v580, 0.0
    %590 = vset.pattern.permute.xlu0 0
    %591 = vperm.xlu0 %590, %v427
    %v592 = vpop.permute.xlu0 %591
    %595 = vset.pattern.permute.xlu0 0
    %596 = vperm.xlu0 %595, %v428
    %v597 = vpop.permute.xlu0 %596
    %v599 = vmul.f32 %v585, %v592
    %v600 = vmul.f32 %v586, %v592
    %v601 = vmul.f32 %v587, %v597
    %v602 = vmul.f32 %v588, %v597
    %603 = vset.pattern.permute.xlu0 1
    %604 = vperm.xlu0 %603, %v427
    %v605 = vpop.permute.xlu0 %604
    %607 = vset.pattern.permute.xlu0 1
    %608 = vperm.xlu0 %607, %v428
    %v609 = vpop.permute.xlu0 %608
    %v611 = vmul.f32 %v566, %v605
    %v612 = vmul.f32 %v567, %v605
    %v613 = vmul.f32 %v568, %v609
    %v614 = vmul.f32 %v569, %v609
    %v615 = vadd.f32 %v599, %v611
    %v616 = vadd.f32 %v600, %v612
    %v617 = vadd.f32 %v601, %v613
    %v618 = vadd.f32 %v602, %v614
    %619 = vrot.lane.b32.xlu0 %v566, 126
    %v620 = vpop.permute.xlu0 %619
    %621 = vrot.lane.b32.xlu0 %v568, 126
    %v622 = vpop.permute.xlu0 %621
    %623 = vrot.lane.b32.xlu0 %v567, 126
    %v624 = vpop.permute.xlu0 %623
    %625 = vrot.lane.b32.xlu0 %v569, 126
    %v626 = vpop.permute.xlu0 %625
    %vm627 = vcmp.lt.s32.totalorder %v31, 126
    %v628 = vsel %vm627, %v620, %v624
    %v629 = vsel %vm627, %v622, %v626
    %v630 = vsel %vm627, %v624, %v620
    %v631 = vsel %vm627, %v626, %v622
    %vm632 = vcmp.lt.s32.totalorder %v55, 126
    %vm633 = vcmp.lt.s32.totalorder %v56, 126
    %v634 = vsel %vm632, %v628, 0.0
    %v635 = vsel %vm633, %v630, 0.0
    %v636 = vsel %vm632, %v629, 0.0
    %v637 = vsel %vm633, %v631, 0.0
    %638 = vset.pattern.permute.xlu0 2
    %639 = vperm.xlu0 %638, %v427
    %v640 = vpop.permute.xlu0 %639
    %642 = vset.pattern.permute.xlu0 2
    %643 = vperm.xlu0 %642, %v428
    %v644 = vpop.permute.xlu0 %643
    %v646 = vmul.f32 %v634, %v640
    %v647 = vmul.f32 %v635, %v640
    %v648 = vmul.f32 %v636, %v644
    %v649 = vmul.f32 %v637, %v644
    %v650 = vadd.f32 %v615, %v646
    %v651 = vadd.f32 %v616, %v647
    %v652 = vadd.f32 %v617, %v648
    %v653 = vadd.f32 %v618, %v649
    %655 = vset.pattern.permute.xlu0 0
    %656 = vperm.xlu0 %655, %v430
    %v657 = vpop.permute.xlu0 %656
    %660 = vset.pattern.permute.xlu0 0
    %661 = vperm.xlu0 %660, %v431
    %v662 = vpop.permute.xlu0 %661
    %v664 = vadd.f32 %v650, %v657
    %v665 = vadd.f32 %v651, %v657
    %v666 = vadd.f32 %v652, %v662
    %v667 = vadd.f32 %v653, %v662
    %v668 = vxor.u32 %v664, 2147483648
    %v669 = vxor.u32 %v665, 2147483648
    %v670 = vxor.u32 %v666, 2147483648
    %v671 = vxor.u32 %v667, 2147483648
    %v672 = vmul.f32 %v668, 1.442695
    %v673 = vpow.pop %v672
    %v674 = vmul.f32 %v669, 1.442695
    %v675 = vpow.pop %v674
    %v676 = vmul.f32 %v670, 1.442695
    %v677 = vpow.pop %v676
    %v678 = vmul.f32 %v671, 1.442695
    %v679 = vpow.pop %v678
    %v680 = vadd.f32 %v673, 1.0
    %v681 = vadd.f32 %v675, 1.0
    %v682 = vadd.f32 %v677, 1.0
    %v683 = vadd.f32 %v679, 1.0
    %v684 = vrcp.pop %v680
    %v685 = vmul.f32 %v680, %v684
    %v686 = vsub.f32 1.0, %v685
    %v687 = vmul.f32 %v684, %v686
    %v688 = vadd.f32 %v684, %v687
    %vm689 = vweird.f32 %v680
    %vm690 = vweird.f32 %v684
    %vm691 = vmor %vm689, %vm690
    %v692 = vsel %vm691, %v684, %v688
    %v693 = vand.u32 2147483647, %v680
    %vm694 = vcmp.eq.f32.partialorder %v693, 8.507059e+37
    %v695 = vand.u32 %v680, 2147483648
    %v696 = vor.u32 1.1754944e-38, %v695
    %v697 = vsel %vm694, %v696, %v692
    %v698 = vmul.f32 1.0, %v697
    %v699 = vrcp.pop %v681
    %v700 = vmul.f32 %v681, %v699
    %v701 = vsub.f32 1.0, %v700
    %v702 = vmul.f32 %v699, %v701
    %v703 = vadd.f32 %v699, %v702
    %vm704 = vweird.f32 %v681
    %vm705 = vweird.f32 %v699
    %vm706 = vmor %vm704, %vm705
    %v707 = vsel %vm706, %v699, %v703
    %v708 = vand.u32 2147483647, %v681
    %vm709 = vcmp.eq.f32.partialorder %v708, 8.507059e+37
    %v710 = vand.u32 %v681, 2147483648
    %v711 = vor.u32 1.1754944e-38, %v710
    %v712 = vsel %vm709, %v711, %v707
    %v713 = vmul.f32 1.0, %v712
    %v714 = vrcp.pop %v682
    %v715 = vmul.f32 %v682, %v714
    %v716 = vsub.f32 1.0, %v715
    %v717 = vmul.f32 %v714, %v716
    %v718 = vadd.f32 %v714, %v717
    %vm719 = vweird.f32 %v682
    %vm720 = vweird.f32 %v714
    %vm721 = vmor %vm719, %vm720
    %v722 = vsel %vm721, %v714, %v718
    %v723 = vand.u32 2147483647, %v682
    %vm724 = vcmp.eq.f32.partialorder %v723, 8.507059e+37
    %v725 = vand.u32 %v682, 2147483648
    %v726 = vor.u32 1.1754944e-38, %v725
    %v727 = vsel %vm724, %v726, %v722
    %v728 = vmul.f32 1.0, %v727
    %v729 = vrcp.pop %v683
    %v730 = vmul.f32 %v683, %v729
    %v731 = vsub.f32 1.0, %v730
    %v732 = vmul.f32 %v729, %v731
    %v733 = vadd.f32 %v729, %v732
    %vm734 = vweird.f32 %v683
    %vm735 = vweird.f32 %v729
    %vm736 = vmor %vm734, %vm735
    %v737 = vsel %vm736, %v729, %v733
    %v738 = vand.u32 2147483647, %v683
    %vm739 = vcmp.eq.f32.partialorder %v738, 8.507059e+37
    %v740 = vand.u32 %v683, 2147483648
    %v741 = vor.u32 1.1754944e-38, %v740
    %v742 = vsel %vm739, %v741, %v737
    %v743 = vmul.f32 1.0, %v742
    %v744 = vmul.f32 %v664, %v698
    %v745 = vmul.f32 %v665, %v713
    %v746 = vmul.f32 %v666, %v728
    %v747 = vmul.f32 %v667, %v743
    %v748 = vpack.c.bf16 %v746, %v744
    %v749 = vpack.c.bf16 %v747, %v745
    %751 = vset.pattern.permute.xlu0 0
    %752 = vperm.xlu0 %751, %v435
    %v753 = vpop.permute.xlu0 %752
    %v756 = vsel %vm388, %v433, 0
    %758 = vmatpush.bf16.msra.mxu0 0
    %759 = vmatpush.bf16.msra.mxu0 0
    %760 = vmatpush.bf16.msra.mxu0 0
    %761 = vmatpush.bf16.msra.mxu0 0
    %762 = vmatpush.bf16.msra.mxu0 0
    %763 = vmatpush.bf16.msra.mxu0 0
    %764 = vmatpush.bf16.msra.mxu0 0
    %765 = vmatpush.bf16.msra.mxu0 %v748
    %766 = vmatmul.bf16.gmra.mxu0 %v756
    %v767 = vpop.f32.mrf.mxu0
    %v768 = vadd.f32 %v753, %v767
    %v769 = vpop.f32.mrf.mxu0
    %770 = vdwg.mxu0
    %771 = vmatpush.bf16.msra.mxu0 0
    %772 = vmatpush.bf16.msra.mxu0 0
    %773 = vmatpush.bf16.msra.mxu0 0
    %774 = vmatpush.bf16.msra.mxu0 0
    %775 = vmatpush.bf16.msra.mxu0 0
    %776 = vmatpush.bf16.msra.mxu0 0
    %777 = vmatpush.bf16.msra.mxu0 0
    %778 = vmatpush.bf16.msra.mxu0 %v749
    %779 = vmatmul.bf16.gmra.mxu0 %v756
    %v780 = vpop.f32.mrf.mxu0
    %v781 = vadd.f32 %v753, %v780
    %v782 = vpop.f32.mrf.mxu0
    %783 = vdwg.mxu0
    %v784 = vadd.f32 %v418, %v768
    %v785 = vadd.f32 %v419, %v781
    %s786 = scalar_lea.vmem %s1, 16
    %v787 = vld [vmem:[%s786] sm:$0xf]
    %v788 = vld [vmem:[%s786 + $0x4] sm:$0xf]
    %s789 = scalar_lea.vmem %s2, 32
    %v790 = vld [vmem:[%s789] sm:$0xff]
    %v791 = vld [vmem:[%s789 + $0x8] sm:$0xff]
    %s792 = scalar_lea.vmem %s3, 32
    %v793 = vld [vmem:[%s792] sm:$0xff]
    %v794 = vld [vmem:[%s792 + $0x8] sm:$0xff]
    %s795 = scalar_lea.vmem %s4, 32
    %v796 = vld [vmem:[%s795] sm:$0xff]
    %v797 = vld [vmem:[%s795 + $0x8] sm:$0xff]
    %s798 = scalar_lea.vmem %s5, 8
    %v799 = vld [vmem:[%s798] sm:$0xf]
    %s800 = scalar_lea.vmem %s6, 16
    %v801 = vld [vmem:[%s800] sm:$0xff]
    %v802 = vpack.c.bf16 %v784, %v784
    %v803 = vpack.c.bf16 %v785, %v785
    %805 = vset.pattern.permute.xlu0 0
    %806 = vperm.xlu0 %805, %v790
    %v807 = vpop.permute.xlu0 %806
    %810 = vset.pattern.permute.xlu0 0
    %811 = vperm.xlu0 %810, %v791
    %v812 = vpop.permute.xlu0 %811
    %v816 = vunpack.c.l.b16 %v787
    %v817 = vunpack.c.l.b16 %v788
    %v818 = vpack.c.b16 %v817, %v816
    %v820 = vsel %vm84, %v818, 0
    %v823 = vsel %vm88, %v802, 0
    %v826 = vsel %vm88, %v803, 0
    %828 = vmatpush.bf16.msra.mxu0 0
    %829 = vmatpush.bf16.msra.mxu0 0
    %830 = vmatpush.bf16.msra.mxu0 0
    %831 = vmatpush.bf16.msra.mxu0 0
    %832 = vmatpush.bf16.msra.mxu0 0
    %833 = vmatpush.bf16.msra.mxu0 0
    %834 = vmatpush.bf16.msra.mxu0 0
    %835 = vmatpush.bf16.msra.mxu0 %v823
    %836 = vmatmul.bf16.gmra.mxu0 %v820
    %v837 = vpop.f32.mrf.mxu0
    %v838 = vadd.f32 %v807, %v837
    %v839 = vpop.f32.mrf.mxu0
    %v840 = vadd.f32 %v812, %v839
    %841 = vdwg.mxu0
    %842 = vmatpush.bf16.msra.mxu0 0
    %843 = vmatpush.bf16.msra.mxu0 0
    %844 = vmatpush.bf16.msra.mxu0 0
    %845 = vmatpush.bf16.msra.mxu0 0
    %846 = vmatpush.bf16.msra.mxu0 0
    %847 = vmatpush.bf16.msra.mxu0 0
    %848 = vmatpush.bf16.msra.mxu0 0
    %849 = vmatpush.bf16.msra.mxu0 %v826
    %850 = vmatmul.bf16.gmra.mxu0 %v820
    %v851 = vpop.f32.mrf.mxu0
    %v852 = vadd.f32 %v807, %v851
    %v853 = vpop.f32.mrf.mxu0
    %v854 = vadd.f32 %v812, %v853
    %855 = vdwg.mxu0
    %v856 = vxor.u32 %v838, 2147483648
    %v857 = vxor.u32 %v852, 2147483648
    %v858 = vxor.u32 %v840, 2147483648
    %v859 = vxor.u32 %v854, 2147483648
    %v860 = vmul.f32 %v856, 1.442695
    %v861 = vpow.pop %v860
    %v862 = vmul.f32 %v857, 1.442695
    %v863 = vpow.pop %v862
    %v864 = vmul.f32 %v858, 1.442695
    %v865 = vpow.pop %v864
    %v866 = vmul.f32 %v859, 1.442695
    %v867 = vpow.pop %v866
    %v868 = vadd.f32 %v861, 1.0
    %v869 = vadd.f32 %v863, 1.0
    %v870 = vadd.f32 %v865, 1.0
    %v871 = vadd.f32 %v867, 1.0
    %v872 = vrcp.pop %v868
    %v873 = vmul.f32 %v868, %v872
    %v874 = vsub.f32 1.0, %v873
    %v875 = vmul.f32 %v872, %v874
    %v876 = vadd.f32 %v872, %v875
    %vm877 = vweird.f32 %v868
    %vm878 = vweird.f32 %v872
    %vm879 = vmor %vm877, %vm878
    %v880 = vsel %vm879, %v872, %v876
    %v881 = vand.u32 2147483647, %v868
    %vm882 = vcmp.eq.f32.partialorder %v881, 8.507059e+37
    %v883 = vand.u32 %v868, 2147483648
    %v884 = vor.u32 1.1754944e-38, %v883
    %v885 = vsel %vm882, %v884, %v880
    %v886 = vmul.f32 1.0, %v885
    %v887 = vrcp.pop %v869
    %v888 = vmul.f32 %v869, %v887
    %v889 = vsub.f32 1.0, %v888
    %v890 = vmul.f32 %v887, %v889
    %v891 = vadd.f32 %v887, %v890
    %vm892 = vweird.f32 %v869
    %vm893 = vweird.f32 %v887
    %vm894 = vmor %vm892, %vm893
    %v895 = vsel %vm894, %v887, %v891
    %v896 = vand.u32 2147483647, %v869
    %vm897 = vcmp.eq.f32.partialorder %v896, 8.507059e+37
    %v898 = vand.u32 %v869, 2147483648
    %v899 = vor.u32 1.1754944e-38, %v898
    %v900 = vsel %vm897, %v899, %v895
    %v901 = vmul.f32 1.0, %v900
    %v902 = vrcp.pop %v870
    %v903 = vmul.f32 %v870, %v902
    %v904 = vsub.f32 1.0, %v903
    %v905 = vmul.f32 %v902, %v904
    %v906 = vadd.f32 %v902, %v905
    %vm907 = vweird.f32 %v870
    %vm908 = vweird.f32 %v902
    %vm909 = vmor %vm907, %vm908
    %v910 = vsel %vm909, %v902, %v906
    %v911 = vand.u32 2147483647, %v870
    %vm912 = vcmp.eq.f32.partialorder %v911, 8.507059e+37
    %v913 = vand.u32 %v870, 2147483648
    %v914 = vor.u32 1.1754944e-38, %v913
    %v915 = vsel %vm912, %v914, %v910
    %v916 = vmul.f32 1.0, %v915
    %v917 = vrcp.pop %v871
    %v918 = vmul.f32 %v871, %v917
    %v919 = vsub.f32 1.0, %v918
    %v920 = vmul.f32 %v917, %v919
    %v921 = vadd.f32 %v917, %v920
    %vm922 = vweird.f32 %v871
    %vm923 = vweird.f32 %v917
    %vm924 = vmor %vm922, %vm923
    %v925 = vsel %vm924, %v917, %v921
    %v926 = vand.u32 2147483647, %v871
    %vm927 = vcmp.eq.f32.partialorder %v926, 8.507059e+37
    %v928 = vand.u32 %v871, 2147483648
    %v929 = vor.u32 1.1754944e-38, %v928
    %v930 = vsel %vm927, %v929, %v925
    %v931 = vmul.f32 1.0, %v930
    %v932 = vmul.f32 %v838, %v886
    %v933 = vmul.f32 %v852, %v901
    %v934 = vmul.f32 %v840, %v916
    %v935 = vmul.f32 %v854, %v931
    %936 = vrot.lane.b32.xlu0 %v932, 4
    %v937 = vpop.permute.xlu0 %936
    %938 = vrot.lane.b32.xlu0 %v934, 4
    %v939 = vpop.permute.xlu0 %938
    %940 = vrot.lane.b32.xlu0 %v933, 4
    %v941 = vpop.permute.xlu0 %940
    %942 = vrot.lane.b32.xlu0 %v935, 4
    %v943 = vpop.permute.xlu0 %942
    %vm944 = vcmp.lt.s32.totalorder %v31, 4
    %v945 = vsel %vm944, %v937, %v941
    %v946 = vsel %vm944, %v939, %v943
    %v947 = vsel %vm944, %v941, %v937
    %v948 = vsel %vm944, %v943, %v939
    %vm949 = vcmp.ge.s32.totalorder %v55, 4
    %vm950 = vcmp.ge.s32.totalorder %v56, 4
    %v951 = vsel %vm949, %v947, 0.0
    %v952 = vsel %vm950, %v945, 0.0
    %v953 = vsel %vm949, %v948, 0.0
    %v954 = vsel %vm950, %v946, 0.0
    %956 = vset.pattern.permute.xlu0 0
    %957 = vperm.xlu0 %956, %v793
    %v958 = vpop.permute.xlu0 %957
    %961 = vset.pattern.permute.xlu0 0
    %962 = vperm.xlu0 %961, %v794
    %v963 = vpop.permute.xlu0 %962
    %v965 = vmul.f32 %v951, %v958
    %v966 = vmul.f32 %v952, %v958
    %v967 = vmul.f32 %v953, %v963
    %v968 = vmul.f32 %v954, %v963
    %969 = vset.pattern.permute.xlu0 1
    %970 = vperm.xlu0 %969, %v793
    %v971 = vpop.permute.xlu0 %970
    %973 = vset.pattern.permute.xlu0 1
    %974 = vperm.xlu0 %973, %v794
    %v975 = vpop.permute.xlu0 %974
    %v977 = vmul.f32 %v932, %v971
    %v978 = vmul.f32 %v933, %v971
    %v979 = vmul.f32 %v934, %v975
    %v980 = vmul.f32 %v935, %v975
    %v981 = vadd.f32 %v965, %v977
    %v982 = vadd.f32 %v966, %v978
    %v983 = vadd.f32 %v967, %v979
    %v984 = vadd.f32 %v968, %v980
    %985 = vrot.lane.b32.xlu0 %v932, 124
    %v986 = vpop.permute.xlu0 %985
    %987 = vrot.lane.b32.xlu0 %v934, 124
    %v988 = vpop.permute.xlu0 %987
    %989 = vrot.lane.b32.xlu0 %v933, 124
    %v990 = vpop.permute.xlu0 %989
    %991 = vrot.lane.b32.xlu0 %v935, 124
    %v992 = vpop.permute.xlu0 %991
    %vm993 = vcmp.lt.s32.totalorder %v31, 124
    %v994 = vsel %vm993, %v986, %v990
    %v995 = vsel %vm993, %v988, %v992
    %v996 = vsel %vm993, %v990, %v986
    %v997 = vsel %vm993, %v992, %v988
    %vm998 = vcmp.lt.s32.totalorder %v55, 124
    %vm999 = vcmp.lt.s32.totalorder %v56, 124
    %v1000 = vsel %vm998, %v994, 0.0
    %v1001 = vsel %vm999, %v996, 0.0
    %v1002 = vsel %vm998, %v995, 0.0
    %v1003 = vsel %vm999, %v997, 0.0
    %1004 = vset.pattern.permute.xlu0 2
    %1005 = vperm.xlu0 %1004, %v793
    %v1006 = vpop.permute.xlu0 %1005
    %1008 = vset.pattern.permute.xlu0 2
    %1009 = vperm.xlu0 %1008, %v794
    %v1010 = vpop.permute.xlu0 %1009
    %v1012 = vmul.f32 %v1000, %v1006
    %v1013 = vmul.f32 %v1001, %v1006
    %v1014 = vmul.f32 %v1002, %v1010
    %v1015 = vmul.f32 %v1003, %v1010
    %v1016 = vadd.f32 %v981, %v1012
    %v1017 = vadd.f32 %v982, %v1013
    %v1018 = vadd.f32 %v983, %v1014
    %v1019 = vadd.f32 %v984, %v1015
    %1021 = vset.pattern.permute.xlu0 0
    %1022 = vperm.xlu0 %1021, %v796
    %v1023 = vpop.permute.xlu0 %1022
    %1026 = vset.pattern.permute.xlu0 0
    %1027 = vperm.xlu0 %1026, %v797
    %v1028 = vpop.permute.xlu0 %1027
    %v1030 = vadd.f32 %v1016, %v1023
    %v1031 = vadd.f32 %v1017, %v1023
    %v1032 = vadd.f32 %v1018, %v1028
    %v1033 = vadd.f32 %v1019, %v1028
    %v1034 = vxor.u32 %v1030, 2147483648
    %v1035 = vxor.u32 %v1031, 2147483648
    %v1036 = vxor.u32 %v1032, 2147483648
    %v1037 = vxor.u32 %v1033, 2147483648
    %v1038 = vmul.f32 %v1034, 1.442695
    %v1039 = vpow.pop %v1038
    %v1040 = vmul.f32 %v1035, 1.442695
    %v1041 = vpow.pop %v1040
    %v1042 = vmul.f32 %v1036, 1.442695
    %v1043 = vpow.pop %v1042
    %v1044 = vmul.f32 %v1037, 1.442695
    %v1045 = vpow.pop %v1044
    %v1046 = vadd.f32 %v1039, 1.0
    %v1047 = vadd.f32 %v1041, 1.0
    %v1048 = vadd.f32 %v1043, 1.0
    %v1049 = vadd.f32 %v1045, 1.0
    %v1050 = vrcp.pop %v1046
    %v1051 = vmul.f32 %v1046, %v1050
    %v1052 = vsub.f32 1.0, %v1051
    %v1053 = vmul.f32 %v1050, %v1052
    %v1054 = vadd.f32 %v1050, %v1053
    %vm1055 = vweird.f32 %v1046
    %vm1056 = vweird.f32 %v1050
    %vm1057 = vmor %vm1055, %vm1056
    %v1058 = vsel %vm1057, %v1050, %v1054
    %v1059 = vand.u32 2147483647, %v1046
    %vm1060 = vcmp.eq.f32.partialorder %v1059, 8.507059e+37
    %v1061 = vand.u32 %v1046, 2147483648
    %v1062 = vor.u32 1.1754944e-38, %v1061
    %v1063 = vsel %vm1060, %v1062, %v1058
    %v1064 = vmul.f32 1.0, %v1063
    %v1065 = vrcp.pop %v1047
    %v1066 = vmul.f32 %v1047, %v1065
    %v1067 = vsub.f32 1.0, %v1066
    %v1068 = vmul.f32 %v1065, %v1067
    %v1069 = vadd.f32 %v1065, %v1068
    %vm1070 = vweird.f32 %v1047
    %vm1071 = vweird.f32 %v1065
    %vm1072 = vmor %vm1070, %vm1071
    %v1073 = vsel %vm1072, %v1065, %v1069
    %v1074 = vand.u32 2147483647, %v1047
    %vm1075 = vcmp.eq.f32.partialorder %v1074, 8.507059e+37
    %v1076 = vand.u32 %v1047, 2147483648
    %v1077 = vor.u32 1.1754944e-38, %v1076
    %v1078 = vsel %vm1075, %v1077, %v1073
    %v1079 = vmul.f32 1.0, %v1078
    %v1080 = vrcp.pop %v1048
    %v1081 = vmul.f32 %v1048, %v1080
    %v1082 = vsub.f32 1.0, %v1081
    %v1083 = vmul.f32 %v1080, %v1082
    %v1084 = vadd.f32 %v1080, %v1083
    %vm1085 = vweird.f32 %v1048
    %vm1086 = vweird.f32 %v1080
    %vm1087 = vmor %vm1085, %vm1086
    %v1088 = vsel %vm1087, %v1080, %v1084
    %v1089 = vand.u32 2147483647, %v1048
    %vm1090 = vcmp.eq.f32.partialorder %v1089, 8.507059e+37
    %v1091 = vand.u32 %v1048, 2147483648
    %v1092 = vor.u32 1.1754944e-38, %v1091
    %v1093 = vsel %vm1090, %v1092, %v1088
    %v1094 = vmul.f32 1.0, %v1093
    %v1095 = vrcp.pop %v1049
    %v1096 = vmul.f32 %v1049, %v1095
    %v1097 = vsub.f32 1.0, %v1096
    %v1098 = vmul.f32 %v1095, %v1097
    %v1099 = vadd.f32 %v1095, %v1098
    %vm1100 = vweird.f32 %v1049
    %vm1101 = vweird.f32 %v1095
    %vm1102 = vmor %vm1100, %vm1101
    %v1103 = vsel %vm1102, %v1095, %v1099
    %v1104 = vand.u32 2147483647, %v1049
    %vm1105 = vcmp.eq.f32.partialorder %v1104, 8.507059e+37
    %v1106 = vand.u32 %v1049, 2147483648
    %v1107 = vor.u32 1.1754944e-38, %v1106
    %v1108 = vsel %vm1105, %v1107, %v1103
    %v1109 = vmul.f32 1.0, %v1108
    %v1110 = vmul.f32 %v1030, %v1064
    %v1111 = vmul.f32 %v1031, %v1079
    %v1112 = vmul.f32 %v1032, %v1094
    %v1113 = vmul.f32 %v1033, %v1109
    %v1114 = vpack.c.bf16 %v1112, %v1110
    %v1115 = vpack.c.bf16 %v1113, %v1111
    %1117 = vset.pattern.permute.xlu0 0
    %1118 = vperm.xlu0 %1117, %v801
    %v1119 = vpop.permute.xlu0 %1118
    %v1122 = vsel %vm388, %v799, 0
    %1124 = vmatpush.bf16.msra.mxu0 0
    %1125 = vmatpush.bf16.msra.mxu0 0
    %1126 = vmatpush.bf16.msra.mxu0 0
    %1127 = vmatpush.bf16.msra.mxu0 0
    %1128 = vmatpush.bf16.msra.mxu0 0
    %1129 = vmatpush.bf16.msra.mxu0 0
    %1130 = vmatpush.bf16.msra.mxu0 0
    %1131 = vmatpush.bf16.msra.mxu0 %v1114
    %1132 = vmatmul.bf16.gmra.mxu0 %v1122
    %v1133 = vpop.f32.mrf.mxu0
    %v1134 = vadd.f32 %v1119, %v1133
    %v1135 = vpop.f32.mrf.mxu0
    %1136 = vdwg.mxu0
    %1137 = vmatpush.bf16.msra.mxu0 0
    %1138 = vmatpush.bf16.msra.mxu0 0
    %1139 = vmatpush.bf16.msra.mxu0 0
    %1140 = vmatpush.bf16.msra.mxu0 0
    %1141 = vmatpush.bf16.msra.mxu0 0
    %1142 = vmatpush.bf16.msra.mxu0 0
    %1143 = vmatpush.bf16.msra.mxu0 0
    %1144 = vmatpush.bf16.msra.mxu0 %v1115
    %1145 = vmatmul.bf16.gmra.mxu0 %v1122
    %v1146 = vpop.f32.mrf.mxu0
    %v1147 = vadd.f32 %v1119, %v1146
    %v1148 = vpop.f32.mrf.mxu0
    %1149 = vdwg.mxu0
    %v1150 = vadd.f32 %v784, %v1134
    %v1151 = vadd.f32 %v785, %v1147
    %1152 = vst [vmem:[#allocation2] sm:$0xff] %v1150
    %1153 = vst [vmem:[#allocation2 + $0x8] sm:$0xff] %v1151
    // Predicated region
    $region30: #{tpu_custom_call.1} parent=1 // pred_check
      _
    $region31: #{tpu_custom_call.1} parent=1 // pred_check_branch
      %1155 = sbr.rel (0) target = $region33
    $region32: #{tpu_custom_call.1} parent=1 // pred_region
      %1157 = vsyncadd [#allocation3], 0
      %s1159 = sshll.u32 [#allocation2], 4
      %s1160 = int_to_ptr.vmem [resolvable:$true] %s1159
      %s1161 = sshll.u32 %s7, 4
      %s1162 = int_to_ptr.hbm [resolvable:$true] %s1161
      %1164 = dma.vmem_to_hbm [thread:$0]  %s1160, 256, %s1162, [#allocation3]
    $region33: #{tpu_custom_call.1} parent=1 // pred_fallthru
      _
    // Predicated region
    $region34: #{tpu_custom_call.1} parent=1 // pred_check
      _
    $region35: #{tpu_custom_call.1} parent=1 // pred_check_branch
      %1166 = sbr.rel (0) target = $region37
    $region36: #{tpu_custom_call.1} parent=1 // pred_region
      %1168 = dma.done [#allocation3], 256
    $region37: #{tpu_custom_call.1} parent=1 // pred_fallthru
      _
    %1169 = vsyncpa [#allocation3], 1

</llo_original>
